<compile_context>
chip_gen: v6e
topology: v6e:2x2x1
jax: 0.10.0
libtpu: 0.0.40
codegen_flags: <defaults>
</compile_context>

<pallas_src>
import jax
import jax.numpy as jnp
from jax.experimental import pallas as pl
from jax.experimental.pallas import tpu as pltpu
import numpy as np

C_IN = 256
BOARD = 19
HW = BOARD * BOARD          # 361
FC1_OUT = 256
BN_EPS = 1e-5


def _cdiv(a, b):
    return -(-a // b)


def _pick_batch_block(n, itemsize):
    """Pick the per-grid-step batch block NB.

    Prefers large blocks (amortize per-step pipeline overhead, bigger
    contiguous DMAs) but keeps >=2 grid steps whenever the batch allows it
    (v7x megacore) and avoids excessive zero-padding of the tail block.
    64-sample blocks are only allowed for <=2-byte activations (bf16) so the
    redundant block-diagonal MXU work stays shadowed by the HBM read on v5e.
    """
    max_nb = 64 if itemsize <= 2 else 32
    best_nb, best_cost = 8, None
    for nb in (8, 16, 32, 64):
        if nb > max_nb:
            continue
        steps = _cdiv(n, nb)
        # Cost in "sample equivalents": padded DMA volume + per-step overhead.
        cost = steps * nb + 3 * steps
        if steps < 2 and n > 8:
            cost += n          # a 1-step grid idles one v7x TensorCore
        if best_cost is None or cost < best_cost:
            best_nb, best_cost = nb, cost
    return best_nb


def value_head_kernel(x_ref, wblk_ref, w1t_ref, b1_ref, w2t_ref, scal_ref, o_ref):
    # x_ref   : (NB*256, 361)  channel-major activations for NB samples (native dtype)
    # wblk_ref: (NB, NB*256)   block-diagonal folded conv*BN weight (same dtype as x)
    # w1t_ref : (361, 256)     fc1 weight, transposed (f32)
    # b1_ref  : (1, 256)       fc1 bias (f32)
    # w2t_ref : (256, 1)       fc2 weight, transposed (f32)
    # scal_ref: (2,)  SMEM     [folded conv/BN bias, fc2 bias]
    # o_ref   : (NB, 1)
    # 1x1 conv + folded BN as ONE lane-dense matmul; f32 accumulation on the MXU.
    z = jnp.dot(wblk_ref[...], x_ref[...], preferred_element_type=jnp.float32)
    z = jnp.maximum(z + scal_ref[0], 0.0)
    # fc1 + relu (small, kept in f32 — compute has large slack).
    h = jnp.dot(z, w1t_ref[...], preferred_element_type=jnp.float32) + b1_ref[...]
    h = jnp.maximum(h, 0.0)
    # fc2 + tanh, single store for the whole block.
    v = jnp.dot(h, w2t_ref[...], preferred_element_type=jnp.float32) + scal_ref[1]
    o_ref[...] = jnp.tanh(v)


def value_head_pallas(x_nchw, params):
    n = x_nchw.shape[0]
    x_dtype = x_nchw.dtype
    itemsize = jnp.dtype(x_dtype).itemsize

    nb = _pick_batch_block(n, itemsize)
    steps = _cdiv(n, nb)
    n_pad = steps * nb

    # Free view: (N, 256, 19, 19) -> (N*256, 361), native dtype (no upcast).
    x2 = x_nchw.reshape(n * C_IN, HW)
    if n_pad != n:
        # Zero-pad the batch so every grid step sees a full block (tail handled
        # by slicing the output); replaces the old whole-batch fallback.
        x2 = jnp.pad(x2, ((0, (n_pad - n) * C_IN), (0, 0)))

    # Fold BN (eval-mode running stats) + conv bias into the 1x1 conv.
    # TODO(synk): nn.BatchNorm2d in train() mode uses batch statistics; this
    # kernel implements eval-mode BN (affine normalize with running stats).
    f32 = jnp.float32
    scale = (params["bn_gamma"].reshape(()).astype(f32)
             / jnp.sqrt(params["bn_var"].reshape(()).astype(f32) + BN_EPS))
    wc_fold = params["conv_w"].reshape(C_IN).astype(f32) * scale          # (256,)
    b_fold = ((params["conv_b"].reshape(()).astype(f32)
               - params["bn_mean"].reshape(()).astype(f32)) * scale
              + params["bn_beta"].reshape(()).astype(f32))

    # Block-diagonal conv weight: row r holds wc_fold at columns [r*256,(r+1)*256).
    # Cast to the activation dtype -> bf16xbf16 MXU matmul (f32 accumulate).
    wblk = (jnp.eye(nb, dtype=f32)[:, :, None]
            * wc_fold[None, None, :]).reshape(nb, nb * C_IN).astype(x_dtype)

    w1t = params["fc1_w"].astype(f32).T                          # (361, 256)
    b1 = params["fc1_b"].astype(f32).reshape(1, FC1_OUT)         # (1, 256)
    w2t = params["fc2_w"].astype(f32).T                          # (256, 1)
    scal = jnp.stack([b_fold,
                      params["fc2_b"].reshape(()).astype(f32)])  # (2,)

    x_rows = nb * C_IN
    grid = (steps,)

    # VMEM budget: double-buffered blocks with lane/sublane padding included
    # (361 -> 384 lanes, etc.) plus headroom.  Stays well under v7x's 64 MiB.
    def _tile_bytes(rows, cols, nbytes):
        return _cdiv(max(rows, 1), 8) * 8 * _cdiv(cols, 128) * 128 * nbytes

    need = 2 * (_tile_bytes(x_rows, HW, itemsize)
                + _tile_bytes(nb, x_rows, itemsize)
                + _tile_bytes(HW, FC1_OUT, 4)
                + _tile_bytes(1, FC1_OUT, 4)
                + _tile_bytes(FC1_OUT, 1, 4)
                + _tile_bytes(nb, 1, 4)) + (8 << 20)
    vmem_limit = int(max(need, 32 << 20))

    # Scheduling hint: multi-microsecond, HBM-read-bound custom call.
    flops = 2 * steps * (nb * nb * C_IN * HW + nb * HW * FC1_OUT + nb * FC1_OUT)
    bytes_accessed = (x2.size * itemsize + wblk.size * itemsize
                      + (HW * FC1_OUT + 2 * FC1_OUT + 1 + 2) * 4 + n_pad * 4)
    cost = pl.CostEstimate(flops=int(flops), transcendentals=int(n_pad),
                           bytes_accessed=int(bytes_accessed))

    out = pl.pallas_call(
        value_head_kernel,
        out_shape=jax.ShapeDtypeStruct((n_pad, 1), jnp.float32),
        grid=grid,
        in_specs=[
            pl.BlockSpec((x_rows, HW), lambda i: (i, 0)),        # x: blocked over batch
            # TODO(synk): the four weight inputs below have constant block
            # indices; pipeline_mode=pl.Buffered(1) would drop their second
            # VMEM buffer (only matters for headroom on v7x's 64 MiB VMEM).
            pl.BlockSpec((nb, x_rows), lambda i: (0, 0)),        # block-diag conv weight
            pl.BlockSpec((HW, FC1_OUT), lambda i: (0, 0)),       # fc1 weight^T
            pl.BlockSpec((1, FC1_OUT), lambda i: (0, 0)),        # fc1 bias
            pl.BlockSpec((FC1_OUT, 1), lambda i: (0, 0)),        # fc2 weight^T
            pl.BlockSpec(memory_space=pltpu.MemorySpace.SMEM),   # scalar biases
        ],
        out_specs=pl.BlockSpec((nb, 1), lambda i: (i, 0)),
        compiler_params=pltpu.CompilerParams(
            dimension_semantics=("parallel",),
            vmem_limit_bytes=vmem_limit),
        cost_estimate=cost,
    )(x2, wblk, w1t, b1, w2t, scal)

    return out[:n] if n_pad != n else out


def value_head_ref(x_nchw, params):
    # Pure-JAX reference mirroring the PyTorch forward (BN in eval mode), f32.
    n = x_nchw.shape[0]
    w = params["conv_w"].reshape(1, C_IN)
    out = jnp.einsum("nchw,oc->nohw", x_nchw, w) + params["conv_b"].reshape(1, 1, 1, 1)
    out = (params["bn_gamma"] * (out - params["bn_mean"])
           / jnp.sqrt(params["bn_var"] + BN_EPS) + params["bn_beta"])
    out = jnp.maximum(out, 0.0)
    out = out.reshape(n, -1)                          # (N, 361)
    out = out @ params["fc1_w"].T + params["fc1_b"]
    out = jnp.maximum(out, 0.0)
    out = out @ params["fc2_w"].T + params["fc2_b"]
    return jnp.tanh(out)                              # (N, 1)


def make_params(key):
    ks = jax.random.split(key, 8)
    p = {
        "conv_w": 0.05 * jax.random.normal(ks[0], (1, C_IN, 1, 1), jnp.float32),
        "conv_b": 0.05 * jax.random.normal(ks[1], (1,), jnp.float32),
        "bn_gamma": 1.0 + 0.1 * jax.random.normal(ks[2], (1,), jnp.float32),
        "bn_beta": 0.1 * jax.random.normal(ks[3], (1,), jnp.float32),
        "bn_mean": 0.1 * jax.random.normal(ks[4], (1,), jnp.float32),
        "bn_var": 1.0 + 0.1 * jnp.abs(jax.random.normal(ks[5], (1,), jnp.float32)),
        "fc1_w": 0.05 * jax.random.normal(ks[6], (FC1_OUT, HW), jnp.float32),
        "fc1_b": 0.05 * jax.random.normal(ks[7], (FC1_OUT,), jnp.float32),
    }
    k2 = jax.random.split(ks[7], 2)
    p["fc2_w"] = 0.05 * jax.random.normal(k2[0], (1, FC1_OUT), jnp.float32)
    p["fc2_b"] = 0.05 * jax.random.normal(k2[1], (1,), jnp.float32)
    return p


if __name__ == "__main__":
    key = jax.random.PRNGKey(0)
    kx, kp = jax.random.split(key)
    batch = 2
    # bf16 activations: the kernel reads x in its native dtype (no f32 upcast),
    # halving the dominant HBM read.  Module shape is fixed by fc1 (256ch, 19x19).
    x = jax.random.normal(kx, (batch, C_IN, BOARD, BOARD), jnp.bfloat16)
    params = make_params(kp)

    out = jax.block_until_ready(value_head_pallas(x, params))

    ref = value_head_ref(x.astype(jnp.float32), params)
    np.testing.assert_allclose(np.asarray(out), np.asarray(ref), rtol=2e-2, atol=1e-2)
    assert out.shape == (batch, 1)
    print("KERNEL_OK")
</pallas_src>

<mosaic_0001>
module attributes {stable_mosaic.version = 11 : i64} {
  func.func @value_head_kernel(%arg0: i32, %arg1: memref<2048x361xbf16, #tpu.memory_space<vmem>>, %arg2: memref<8x2048xbf16, #tpu.memory_space<vmem>>, %arg3: memref<361x256xf32, #tpu.memory_space<vmem>>, %arg4: memref<1x256xf32, #tpu.memory_space<vmem>>, %arg5: memref<256x1xf32, #tpu.memory_space<vmem>>, %arg6: memref<2xf32, #tpu.memory_space<smem>>, %arg7: memref<8x1xf32, #tpu.memory_space<vmem>>) attributes {dimension_semantics = [#tpu.dimension_semantics<parallel>], iteration_bounds = array<i64: 1>, scalar_prefetch = 0 : i64, scratch_operands = 0 : i64, tpu.core_type = #tpu.core_type<tc>, window_params = [{transform_indices = @transform_0, window_bounds = array<i64: 2048, 361>}, {pipeline_mode = #tpu.pipeline_mode<synchronous>, transform_indices = @transform_1, window_bounds = array<i64: 8, 2048>}, {pipeline_mode = #tpu.pipeline_mode<synchronous>, transform_indices = @transform_2, window_bounds = array<i64: 361, 256>}, {pipeline_mode = #tpu.pipeline_mode<synchronous>, transform_indices = @transform_3, window_bounds = array<i64: 1, 256>}, {pipeline_mode = #tpu.pipeline_mode<synchronous>, transform_indices = @transform_4, window_bounds = array<i64: 256, 1>}, {transform_indices = @transform_5, window_bounds = array<i64: 2>}, {transform_indices = @transform_6, window_bounds = array<i64: 8, 1>}]} {
    %c0 = arith.constant 0 : index
    %c0_0 = arith.constant 0 : index
    %0 = vector.load %arg2[%c0, %c0_0] : memref<8x2048xbf16, #tpu.memory_space<vmem>>, vector<8x2048xbf16>
    %c0_1 = arith.constant 0 : index
    %c0_2 = arith.constant 0 : index
    %1 = vector.load %arg1[%c0_1, %c0_2] : memref<2048x361xbf16, #tpu.memory_space<vmem>>, vector<2048x361xbf16>
    %cst = arith.constant dense<0.000000e+00> : vector<8x361xf32>
    %2 = tpu.matmul %0, %1, %cst {dimension_numbers = #tpu.dot_dimension_numbers<[1], [0], [0], [1], [0, 0, 1, 1], [], []>} : vector<8x2048xbf16>, vector<2048x361xbf16>, vector<8x361xf32> -> vector<8x361xf32>
    %c0_3 = arith.constant 0 : index
    %3 = memref.load %arg6[%c0_3] : memref<2xf32, #tpu.memory_space<smem>>
    %4 = vector.broadcast %3 : f32 to vector<8x361xf32>
    %5 = arith.addf %2, %4 : vector<8x361xf32>
    %cst_4 = arith.constant 0.000000e+00 : f32
    %6 = vector.broadcast %cst_4 : f32 to vector<8x361xf32>
    %7 = arith.maximumf %5, %6 : vector<8x361xf32>
    %c0_5 = arith.constant 0 : index
    %c0_6 = arith.constant 0 : index
    %8 = vector.load %arg3[%c0_5, %c0_6] : memref<361x256xf32, #tpu.memory_space<vmem>>, vector<361x256xf32>
    %cst_7 = arith.constant dense<0.000000e+00> : vector<8x256xf32>
    %9 = tpu.matmul %7, %8, %cst_7 {dimension_numbers = #tpu.dot_dimension_numbers<[1], [0], [0], [1], [0, 0, 1, 1], [], []>} : vector<8x361xf32>, vector<361x256xf32>, vector<8x256xf32> -> vector<8x256xf32>
    %c0_8 = arith.constant 0 : index
    %c0_9 = arith.constant 0 : index
    %10 = vector.load %arg4[%c0_8, %c0_9] : memref<1x256xf32, #tpu.memory_space<vmem>>, vector<1x256xf32>
    %11 = vector.broadcast %10 : vector<1x256xf32> to vector<8x256xf32>
    %12 = arith.addf %9, %11 : vector<8x256xf32>
    %cst_10 = arith.constant 0.000000e+00 : f32
    %13 = vector.broadcast %cst_10 : f32 to vector<8x256xf32>
    %14 = arith.maximumf %12, %13 : vector<8x256xf32>
    %c0_11 = arith.constant 0 : index
    %c0_12 = arith.constant 0 : index
    %15 = vector.load %arg5[%c0_11, %c0_12] : memref<256x1xf32, #tpu.memory_space<vmem>>, vector<256x1xf32>
    %cst_13 = arith.constant dense<0.000000e+00> : vector<8x1xf32>
    %16 = tpu.matmul %14, %15, %cst_13 {dimension_numbers = #tpu.dot_dimension_numbers<[1], [0], [0], [1], [0, 0, 1, 1], [], []>} : vector<8x256xf32>, vector<256x1xf32>, vector<8x1xf32> -> vector<8x1xf32>
    %c1 = arith.constant 1 : index
    %17 = memref.load %arg6[%c1] : memref<2xf32, #tpu.memory_space<smem>>
    %18 = vector.broadcast %17 : f32 to vector<8x1xf32>
    %19 = arith.addf %16, %18 : vector<8x1xf32>
    %20 = math.tanh %19 : vector<8x1xf32>
    %c0_14 = arith.constant 0 : index
    %c0_15 = arith.constant 0 : index
    %21 = vector.load %arg7[%c0_14, %c0_15] : memref<8x1xf32, #tpu.memory_space<vmem>>, vector<8x1xf32>
    tpu.vector_store %arg7[%c0_14, %c0_15], %20 {strides = array<i32>} : memref<8x1xf32, #tpu.memory_space<vmem>>, vector<8x1xf32>,
    return
  }
  func.func @transform_0(%arg0: i32) -> (i32, i32) {
    %c0_i32 = arith.constant 0 : i32
    %c0_i32_0 = arith.constant 0 : i32
    return %arg0, %c0_i32 : i32, i32
  }
  func.func @transform_1(%arg0: i32) -> (i32, i32) {
    %c0_i32 = arith.constant 0 : i32
    %c0_i32_0 = arith.constant 0 : i32
    %c0_i32_1 = arith.constant 0 : i32
    return %c0_i32, %c0_i32_0 : i32, i32
  }
  func.func @transform_2(%arg0: i32) -> (i32, i32) {
    %c0_i32 = arith.constant 0 : i32
    %c0_i32_0 = arith.constant 0 : i32
    %c0_i32_1 = arith.constant 0 : i32
    return %c0_i32, %c0_i32_0 : i32, i32
  }
  func.func @transform_3(%arg0: i32) -> (i32, i32) {
    %c0_i32 = arith.constant 0 : i32
    %c0_i32_0 = arith.constant 0 : i32
    %c0_i32_1 = arith.constant 0 : i32
    return %c0_i32, %c0_i32_0 : i32, i32
  }
  func.func @transform_4(%arg0: i32) -> (i32, i32) {
    %c0_i32 = arith.constant 0 : i32
    %c0_i32_0 = arith.constant 0 : i32
    %c0_i32_1 = arith.constant 0 : i32
    return %c0_i32, %c0_i32_0 : i32, i32
  }
  func.func @transform_5(%arg0: i32) -> i32 {
    %c0_i32 = arith.constant 0 : i32
    %c0_i32_0 = arith.constant 0 : i32
    return %c0_i32 : i32
  }
  func.func @transform_6(%arg0: i32) -> (i32, i32) {
    %c0_i32 = arith.constant 0 : i32
    %c0_i32_0 = arith.constant 0 : i32
    return %arg0, %c0_i32 : i32, i32
  }
}

</mosaic_0001>

<llo_original>
// kernel: tpu_custom_call.1
$region0: #{tpu_custom_call.1}
  #allocation0 [shape = 'u32[]', space=smem, size = 0x4, offset = 0x4, fixed_abs, tag = 'smem constant byte address 0x4 - core index']
  #allocation1 [shape = 'u32[144,128]{1,0:T(1,128)}', space=vmem, size = 0x12000, scoped, tag = 'internal scratch']
  %s0 = inlined_call_operand.vmem [shape: bf16[2048,361], index: 0, kind: input, shape index: {}]
  %s1 = inlined_call_operand.vmem [shape: bf16[8,2048], index: 1, kind: input, shape index: {}]
  %s2 = inlined_call_operand.vmem [shape: f32[361,256], index: 2, kind: input, shape index: {}]
  %s3 = inlined_call_operand.vmem [shape: f32[1,256], index: 3, kind: input, shape index: {}]
  %s4 = inlined_call_operand.vmem [shape: f32[256,1], index: 4, kind: input, shape index: {}]
  %s5 = inlined_call_operand.vmem [shape: f32[2], index: 5, kind: input, shape index: {}]
  %s6 = inlined_call_operand.vmem [shape: f32[8,1], index: 6, kind: output, shape index: {}]
  %s7 = sld [smem:[#allocation0]]
  $region38: #{tpu_custom_call.1} parent=0
    _
  %s9 = ssub.s32 1, %s7
  %s10 = scalar_select 0, %s9, %s7
  $region1: #{tpu_custom_call.1} parent=0
    #allocation2 [shape = 'u8[512]{0}', space=smem, size = 0x200, scoped, tag = 'input window, operand 5, single buffered']
    #allocation3 [shape = 's32[1]{0}', space=sflag, size = 0x4, scoped, tag = 'scoped memory for tpu_custom_call.1']
    %11 = vsyncpa [#allocation3], 0
    // Predicated region
    $region2: #{tpu_custom_call.1} parent=1 // pred_check
      _
    $region3: #{tpu_custom_call.1} parent=1 // pred_check_branch
      %13 = sbr.rel (0) target = $region5
    $region4: #{tpu_custom_call.1} parent=1 // pred_region
      _
    $region5: #{tpu_custom_call.1} parent=1 // pred_fallthru
      _
    // Predicated region
    $region6: #{tpu_custom_call.1} parent=1 // pred_check
      _
    $region7: #{tpu_custom_call.1} parent=1 // pred_check_branch
      %15 = sbr.rel (0) target = $region9
    $region8: #{tpu_custom_call.1} parent=1 // pred_region
      _
    $region9: #{tpu_custom_call.1} parent=1 // pred_fallthru
      _
    // Predicated region
    $region10: #{tpu_custom_call.1} parent=1 // pred_check
      _
    $region11: #{tpu_custom_call.1} parent=1 // pred_check_branch
      %17 = sbr.rel (0) target = $region13
    $region12: #{tpu_custom_call.1} parent=1 // pred_region
      _
    $region13: #{tpu_custom_call.1} parent=1 // pred_fallthru
      _
    // Predicated region
    $region14: #{tpu_custom_call.1} parent=1 // pred_check
      _
    $region15: #{tpu_custom_call.1} parent=1 // pred_check_branch
      %19 = sbr.rel (0) target = $region17
    $region16: #{tpu_custom_call.1} parent=1 // pred_region
      _
    $region17: #{tpu_custom_call.1} parent=1 // pred_fallthru
      _
    // Predicated region
    $region18: #{tpu_custom_call.1} parent=1 // pred_check
      _
    $region19: #{tpu_custom_call.1} parent=1 // pred_check_branch
      %21 = sbr.rel (0) target = $region21
    $region20: #{tpu_custom_call.1} parent=1 // pred_region
      _
    $region21: #{tpu_custom_call.1} parent=1 // pred_fallthru
      _
    // Predicated region
    $region22: #{tpu_custom_call.1} parent=1 // pred_check
      _
    $region23: #{tpu_custom_call.1} parent=1 // pred_check_branch
      %23 = sbr.rel (0) target = $region25
    $region24: #{tpu_custom_call.1} parent=1 // pred_region
      %s25 = ssub.s32 16, 16
      %26 = vsyncadd [#allocation3], %s25
      %s28 = sshll.u32 %s5, 4
      %s29 = int_to_ptr.vmem [resolvable:$true] %s28
      %31 = dma.vmem_to_smem %s29, 16, [#allocation2], [#allocation3]
    $region25: #{tpu_custom_call.1} parent=1 // pred_fallthru
      _
    // Predicated region
    $region26: #{tpu_custom_call.1} parent=1 // pred_check
      _
    $region27: #{tpu_custom_call.1} parent=1 // pred_check_branch
      %33 = sbr.rel (0) target = $region29
    $region28: #{tpu_custom_call.1} parent=1 // pred_region
      %34 = dma.done [#allocation3], 16
    $region29: #{tpu_custom_call.1} parent=1 // pred_fallthru
      _
    %35 = sfence
    %v37 = vld [vmem:[%s1] sm:$0xff]
    %v38 = vld [vmem:[%s1 + $0x8] sm:$0xff]
    %v39 = vld [vmem:[%s1 + $0x10] sm:$0xff]
    %v40 = vld [vmem:[%s1 + $0x18] sm:$0xff]
    %v41 = vld [vmem:[%s1 + $0x20] sm:$0xff]
    %v42 = vld [vmem:[%s1 + $0x28] sm:$0xff]
    %v43 = vld [vmem:[%s1 + $0x30] sm:$0xff]
    %v44 = vld [vmem:[%s1 + $0x38] sm:$0xff]
    %v45 = vld [vmem:[%s0] sm:$0xff]
    %v46 = vld [vmem:[%s0 + $0x8] sm:$0xf]
    %v47 = vld [vmem:[%s0 + $0xc] sm:$0xff]
    %v48 = vld [vmem:[%s0 + $0x14] sm:$0xf]
    %v49 = vld [vmem:[%s0 + $0x18] sm:$0xff]
    %v50 = vld [vmem:[%s0 + $0x20] sm:$0xf]
    %v51 = vld [vmem:[%s0 + $0x24] sm:$0xff]
    %v52 = vld [vmem:[%s0 + $0x2c] sm:$0xf]
    %v53 = vld [vmem:[%s0 + $0x30] sm:$0xff]
    %v54 = vld [vmem:[%s0 + $0x38] sm:$0xf]
    %v55 = vld [vmem:[%s0 + $0x3c] sm:$0xff]
    %v56 = vld [vmem:[%s0 + $0x44] sm:$0xf]
    %v57 = vld [vmem:[%s0 + $0x48] sm:$0xff]
    %v58 = vld [vmem:[%s0 + $0x50] sm:$0xf]
    %v59 = vld [vmem:[%s0 + $0x54] sm:$0xff]
    %v60 = vld [vmem:[%s0 + $0x5c] sm:$0xf]
    %v61 = vld [vmem:[%s0 + $0x60] sm:$0xff]
    %v62 = vld [vmem:[%s0 + $0x68] sm:$0xf]
    %v63 = vld [vmem:[%s0 + $0x6c] sm:$0xff]
    %v64 = vld [vmem:[%s0 + $0x74] sm:$0xf]
    %v65 = vld [vmem:[%s0 + $0x78] sm:$0xff]
    %v66 = vld [vmem:[%s0 + $0x80] sm:$0xf]
    %v67 = vld [vmem:[%s0 + $0x84] sm:$0xff]
    %v68 = vld [vmem:[%s0 + $0x8c] sm:$0xf]
    %v69 = vld [vmem:[%s0 + $0x90] sm:$0xff]
    %v70 = vld [vmem:[%s0 + $0x98] sm:$0xf]
    %v71 = vld [vmem:[%s0 + $0x9c] sm:$0xff]
    %v72 = vld [vmem:[%s0 + $0xa4] sm:$0xf]
    %v73 = vld [vmem:[%s0 + $0xa8] sm:$0xff]
    %v74 = vld [vmem:[%s0 + $0xb0] sm:$0xf]
    %v75 = vld [vmem:[%s0 + $0xb4] sm:$0xff]
    %v76 = vld [vmem:[%s0 + $0xbc] sm:$0xf]
    %v77 = vld [vmem:[%s0 + $0xc0] sm:$0xff]
    %v78 = vld [vmem:[%s0 + $0xc8] sm:$0xf]
    %v79 = vld [vmem:[%s0 + $0xcc] sm:$0xff]
    %v80 = vld [vmem:[%s0 + $0xd4] sm:$0xf]
    %v81 = vld [vmem:[%s0 + $0xd8] sm:$0xff]
    %v82 = vld [vmem:[%s0 + $0xe0] sm:$0xf]
    %v83 = vld [vmem:[%s0 + $0xe4] sm:$0xff]
    %v84 = vld [vmem:[%s0 + $0xec] sm:$0xf]
    %v85 = vld [vmem:[%s0 + $0xf0] sm:$0xff]
    %v86 = vld [vmem:[%s0 + $0xf8] sm:$0xf]
    %v87 = vld [vmem:[%s0 + $0xfc] sm:$0xff]
    %v88 = vld [vmem:[%s0 + $0x104] sm:$0xf]
    %v89 = vld [vmem:[%s0 + $0x108] sm:$0xff]
    %v90 = vld [vmem:[%s0 + $0x110] sm:$0xf]
    %v91 = vld [vmem:[%s0 + $0x114] sm:$0xff]
    %v92 = vld [vmem:[%s0 + $0x11c] sm:$0xf]
    %v93 = vld [vmem:[%s0 + $0x120] sm:$0xff]
    %v94 = vld [vmem:[%s0 + $0x128] sm:$0xf]
    %v95 = vld [vmem:[%s0 + $0x12c] sm:$0xff]
    %v96 = vld [vmem:[%s0 + $0x134] sm:$0xf]
    %v97 = vld [vmem:[%s0 + $0x138] sm:$0xff]
    %v98 = vld [vmem:[%s0 + $0x140] sm:$0xf]
    %v99 = vld [vmem:[%s0 + $0x144] sm:$0xff]
    %v100 = vld [vmem:[%s0 + $0x14c] sm:$0xf]
    %v101 = vld [vmem:[%s0 + $0x150] sm:$0xff]
    %v102 = vld [vmem:[%s0 + $0x158] sm:$0xf]
    %v103 = vld [vmem:[%s0 + $0x15c] sm:$0xff]
    %v104 = vld [vmem:[%s0 + $0x164] sm:$0xf]
    %v105 = vld [vmem:[%s0 + $0x168] sm:$0xff]
    %v106 = vld [vmem:[%s0 + $0x170] sm:$0xf]
    %v107 = vld [vmem:[%s0 + $0x174] sm:$0xff]
    %v108 = vld [vmem:[%s0 + $0x17c] sm:$0xf]
    %v109 = vld [vmem:[%s0 + $0x180] sm:$0xff]
    %v110 = vld [vmem:[%s0 + $0x188] sm:$0xf]
    %v111 = vld [vmem:[%s0 + $0x18c] sm:$0xff]
    %v112 = vld [vmem:[%s0 + $0x194] sm:$0xf]
    %v113 = vld [vmem:[%s0 + $0x198] sm:$0xff]
    %v114 = vld [vmem:[%s0 + $0x1a0] sm:$0xf]
    %v115 = vld [vmem:[%s0 + $0x1a4] sm:$0xff]
    %v116 = vld [vmem:[%s0 + $0x1ac] sm:$0xf]
    %v117 = vld [vmem:[%s0 + $0x1b0] sm:$0xff]
    %v118 = vld [vmem:[%s0 + $0x1b8] sm:$0xf]
    %v119 = vld [vmem:[%s0 + $0x1bc] sm:$0xff]
    %v120 = vld [vmem:[%s0 + $0x1c4] sm:$0xf]
    %v121 = vld [vmem:[%s0 + $0x1c8] sm:$0xff]
    %v122 = vld [vmem:[%s0 + $0x1d0] sm:$0xf]
    %v123 = vld [vmem:[%s0 + $0x1d4] sm:$0xff]
    %v124 = vld [vmem:[%s0 + $0x1dc] sm:$0xf]
    %v125 = vld [vmem:[%s0 + $0x1e0] sm:$0xff]
    %v126 = vld [vmem:[%s0 + $0x1e8] sm:$0xf]
    %v127 = vld [vmem:[%s0 + $0x1ec] sm:$0xff]
    %v128 = vld [vmem:[%s0 + $0x1f4] sm:$0xf]
    %v129 = vld [vmem:[%s0 + $0x1f8] sm:$0xff]
    %v130 = vld [vmem:[%s0 + $0x200] sm:$0xf]
    %v131 = vld [vmem:[%s0 + $0x204] sm:$0xff]
    %v132 = vld [vmem:[%s0 + $0x20c] sm:$0xf]
    %v133 = vld [vmem:[%s0 + $0x210] sm:$0xff]
    %v134 = vld [vmem:[%s0 + $0x218] sm:$0xf]
    %v135 = vld [vmem:[%s0 + $0x21c] sm:$0xff]
    %v136 = vld [vmem:[%s0 + $0x224] sm:$0xf]
    %v137 = vld [vmem:[%s0 + $0x228] sm:$0xff]
    %v138 = vld [vmem:[%s0 + $0x230] sm:$0xf]
    %v139 = vld [vmem:[%s0 + $0x234] sm:$0xff]
    %v140 = vld [vmem:[%s0 + $0x23c] sm:$0xf]
    %v141 = vld [vmem:[%s0 + $0x240] sm:$0xff]
    %v142 = vld [vmem:[%s0 + $0x248] sm:$0xf]
    %v143 = vld [vmem:[%s0 + $0x24c] sm:$0xff]
    %v144 = vld [vmem:[%s0 + $0x254] sm:$0xf]
    %v145 = vld [vmem:[%s0 + $0x258] sm:$0xff]
    %v146 = vld [vmem:[%s0 + $0x260] sm:$0xf]
    %v147 = vld [vmem:[%s0 + $0x264] sm:$0xff]
    %v148 = vld [vmem:[%s0 + $0x26c] sm:$0xf]
    %v149 = vld [vmem:[%s0 + $0x270] sm:$0xff]
    %v150 = vld [vmem:[%s0 + $0x278] sm:$0xf]
    %v151 = vld [vmem:[%s0 + $0x27c] sm:$0xff]
    %v152 = vld [vmem:[%s0 + $0x284] sm:$0xf]
    %v153 = vld [vmem:[%s0 + $0x288] sm:$0xff]
    %v154 = vld [vmem:[%s0 + $0x290] sm:$0xf]
    %v155 = vld [vmem:[%s0 + $0x294] sm:$0xff]
    %v156 = vld [vmem:[%s0 + $0x29c] sm:$0xf]
    %v157 = vld [vmem:[%s0 + $0x2a0] sm:$0xff]
    %v158 = vld [vmem:[%s0 + $0x2a8] sm:$0xf]
    %v159 = vld [vmem:[%s0 + $0x2ac] sm:$0xff]
    %v160 = vld [vmem:[%s0 + $0x2b4] sm:$0xf]
    %v161 = vld [vmem:[%s0 + $0x2b8] sm:$0xff]
    %v162 = vld [vmem:[%s0 + $0x2c0] sm:$0xf]
    %v163 = vld [vmem:[%s0 + $0x2c4] sm:$0xff]
    %v164 = vld [vmem:[%s0 + $0x2cc] sm:$0xf]
    %v165 = vld [vmem:[%s0 + $0x2d0] sm:$0xff]
    %v166 = vld [vmem:[%s0 + $0x2d8] sm:$0xf]
    %v167 = vld [vmem:[%s0 + $0x2dc] sm:$0xff]
    %v168 = vld [vmem:[%s0 + $0x2e4] sm:$0xf]
    %v169 = vld [vmem:[%s0 + $0x2e8] sm:$0xff]
    %v170 = vld [vmem:[%s0 + $0x2f0] sm:$0xf]
    %v171 = vld [vmem:[%s0 + $0x2f4] sm:$0xff]
    %v172 = vld [vmem:[%s0 + $0x2fc] sm:$0xf]
    %v173 = vld [vmem:[%s0 + $0x300] sm:$0xff]
    %v174 = vld [vmem:[%s0 + $0x308] sm:$0xf]
    %v175 = vld [vmem:[%s0 + $0x30c] sm:$0xff]
    %v176 = vld [vmem:[%s0 + $0x314] sm:$0xf]
    %v177 = vld [vmem:[%s0 + $0x318] sm:$0xff]
    %v178 = vld [vmem:[%s0 + $0x320] sm:$0xf]
    %v179 = vld [vmem:[%s0 + $0x324] sm:$0xff]
    %v180 = vld [vmem:[%s0 + $0x32c] sm:$0xf]
    %v181 = vld [vmem:[%s0 + $0x330] sm:$0xff]
    %v182 = vld [vmem:[%s0 + $0x338] sm:$0xf]
    %v183 = vld [vmem:[%s0 + $0x33c] sm:$0xff]
    %v184 = vld [vmem:[%s0 + $0x344] sm:$0xf]
    %v185 = vld [vmem:[%s0 + $0x348] sm:$0xff]
    %v186 = vld [vmem:[%s0 + $0x350] sm:$0xf]
    %v187 = vld [vmem:[%s0 + $0x354] sm:$0xff]
    %v188 = vld [vmem:[%s0 + $0x35c] sm:$0xf]
    %v189 = vld [vmem:[%s0 + $0x360] sm:$0xff]
    %v190 = vld [vmem:[%s0 + $0x368] sm:$0xf]
    %v191 = vld [vmem:[%s0 + $0x36c] sm:$0xff]
    %v192 = vld [vmem:[%s0 + $0x374] sm:$0xf]
    %v193 = vld [vmem:[%s0 + $0x378] sm:$0xff]
    %v194 = vld [vmem:[%s0 + $0x380] sm:$0xf]
    %v195 = vld [vmem:[%s0 + $0x384] sm:$0xff]
    %v196 = vld [vmem:[%s0 + $0x38c] sm:$0xf]
    %v197 = vld [vmem:[%s0 + $0x390] sm:$0xff]
    %v198 = vld [vmem:[%s0 + $0x398] sm:$0xf]
    %v199 = vld [vmem:[%s0 + $0x39c] sm:$0xff]
    %v200 = vld [vmem:[%s0 + $0x3a4] sm:$0xf]
    %v201 = vld [vmem:[%s0 + $0x3a8] sm:$0xff]
    %v202 = vld [vmem:[%s0 + $0x3b0] sm:$0xf]
    %v203 = vld [vmem:[%s0 + $0x3b4] sm:$0xff]
    %v204 = vld [vmem:[%s0 + $0x3bc] sm:$0xf]
    %v205 = vld [vmem:[%s0 + $0x3c0] sm:$0xff]
    %v206 = vld [vmem:[%s0 + $0x3c8] sm:$0xf]
    %v207 = vld [vmem:[%s0 + $0x3cc] sm:$0xff]
    %v208 = vld [vmem:[%s0 + $0x3d4] sm:$0xf]
    %v209 = vld [vmem:[%s0 + $0x3d8] sm:$0xff]
    %v210 = vld [vmem:[%s0 + $0x3e0] sm:$0xf]
    %v211 = vld [vmem:[%s0 + $0x3e4] sm:$0xff]
    %v212 = vld [vmem:[%s0 + $0x3ec] sm:$0xf]
    %v213 = vld [vmem:[%s0 + $0x3f0] sm:$0xff]
    %v214 = vld [vmem:[%s0 + $0x3f8] sm:$0xf]
    %v215 = vld [vmem:[%s0 + $0x3fc] sm:$0xff]
    %v216 = vld [vmem:[%s0 + $0x404] sm:$0xf]
    %v217 = vld [vmem:[%s0 + $0x408] sm:$0xff]
    %v218 = vld [vmem:[%s0 + $0x410] sm:$0xf]
    %v219 = vld [vmem:[%s0 + $0x414] sm:$0xff]
    %v220 = vld [vmem:[%s0 + $0x41c] sm:$0xf]
    %v221 = vld [vmem:[%s0 + $0x420] sm:$0xff]
    %v222 = vld [vmem:[%s0 + $0x428] sm:$0xf]
    %v223 = vld [vmem:[%s0 + $0x42c] sm:$0xff]
    %v224 = vld [vmem:[%s0 + $0x434] sm:$0xf]
    %v225 = vld [vmem:[%s0 + $0x438] sm:$0xff]
    %v226 = vld [vmem:[%s0 + $0x440] sm:$0xf]
    %v227 = vld [vmem:[%s0 + $0x444] sm:$0xff]
    %v228 = vld [vmem:[%s0 + $0x44c] sm:$0xf]
    %v229 = vld [vmem:[%s0 + $0x450] sm:$0xff]
    %v230 = vld [vmem:[%s0 + $0x458] sm:$0xf]
    %v231 = vld [vmem:[%s0 + $0x45c] sm:$0xff]
    %v232 = vld [vmem:[%s0 + $0x464] sm:$0xf]
    %v233 = vld [vmem:[%s0 + $0x468] sm:$0xff]
    %v234 = vld [vmem:[%s0 + $0x470] sm:$0xf]
    %v235 = vld [vmem:[%s0 + $0x474] sm:$0xff]
    %v236 = vld [vmem:[%s0 + $0x47c] sm:$0xf]
    %v237 = vld [vmem:[%s0 + $0x480] sm:$0xff]
    %v238 = vld [vmem:[%s0 + $0x488] sm:$0xf]
    %v239 = vld [vmem:[%s0 + $0x48c] sm:$0xff]
    %v240 = vld [vmem:[%s0 + $0x494] sm:$0xf]
    %v241 = vld [vmem:[%s0 + $0x498] sm:$0xff]
    %v242 = vld [vmem:[%s0 + $0x4a0] sm:$0xf]
    %v243 = vld [vmem:[%s0 + $0x4a4] sm:$0xff]
    %v244 = vld [vmem:[%s0 + $0x4ac] sm:$0xf]
    %v245 = vld [vmem:[%s0 + $0x4b0] sm:$0xff]
    %v246 = vld [vmem:[%s0 + $0x4b8] sm:$0xf]
    %v247 = vld [vmem:[%s0 + $0x4bc] sm:$0xff]
    %v248 = vld [vmem:[%s0 + $0x4c4] sm:$0xf]
    %v249 = vld [vmem:[%s0 + $0x4c8] sm:$0xff]
    %v250 = vld [vmem:[%s0 + $0x4d0] sm:$0xf]
    %v251 = vld [vmem:[%s0 + $0x4d4] sm:$0xff]
    %v252 = vld [vmem:[%s0 + $0x4dc] sm:$0xf]
    %v253 = vld [vmem:[%s0 + $0x4e0] sm:$0xff]
    %v254 = vld [vmem:[%s0 + $0x4e8] sm:$0xf]
    %v255 = vld [vmem:[%s0 + $0x4ec] sm:$0xff]
    %v256 = vld [vmem:[%s0 + $0x4f4] sm:$0xf]
    %v257 = vld [vmem:[%s0 + $0x4f8] sm:$0xff]
    %v258 = vld [vmem:[%s0 + $0x500] sm:$0xf]
    %v259 = vld [vmem:[%s0 + $0x504] sm:$0xff]
    %v260 = vld [vmem:[%s0 + $0x50c] sm:$0xf]
    %v261 = vld [vmem:[%s0 + $0x510] sm:$0xff]
    %v262 = vld [vmem:[%s0 + $0x518] sm:$0xf]
    %v263 = vld [vmem:[%s0 + $0x51c] sm:$0xff]
    %v264 = vld [vmem:[%s0 + $0x524] sm:$0xf]
    %v265 = vld [vmem:[%s0 + $0x528] sm:$0xff]
    %v266 = vld [vmem:[%s0 + $0x530] sm:$0xf]
    %v267 = vld [vmem:[%s0 + $0x534] sm:$0xff]
    %v268 = vld [vmem:[%s0 + $0x53c] sm:$0xf]
    %v269 = vld [vmem:[%s0 + $0x540] sm:$0xff]
    %v270 = vld [vmem:[%s0 + $0x548] sm:$0xf]
    %v271 = vld [vmem:[%s0 + $0x54c] sm:$0xff]
    %v272 = vld [vmem:[%s0 + $0x554] sm:$0xf]
    %v273 = vld [vmem:[%s0 + $0x558] sm:$0xff]
    %v274 = vld [vmem:[%s0 + $0x560] sm:$0xf]
    %v275 = vld [vmem:[%s0 + $0x564] sm:$0xff]
    %v276 = vld [vmem:[%s0 + $0x56c] sm:$0xf]
    %v277 = vld [vmem:[%s0 + $0x570] sm:$0xff]
    %v278 = vld [vmem:[%s0 + $0x578] sm:$0xf]
    %v279 = vld [vmem:[%s0 + $0x57c] sm:$0xff]
    %v280 = vld [vmem:[%s0 + $0x584] sm:$0xf]
    %v281 = vld [vmem:[%s0 + $0x588] sm:$0xff]
    %v282 = vld [vmem:[%s0 + $0x590] sm:$0xf]
    %v283 = vld [vmem:[%s0 + $0x594] sm:$0xff]
    %v284 = vld [vmem:[%s0 + $0x59c] sm:$0xf]
    %v285 = vld [vmem:[%s0 + $0x5a0] sm:$0xff]
    %v286 = vld [vmem:[%s0 + $0x5a8] sm:$0xf]
    %v287 = vld [vmem:[%s0 + $0x5ac] sm:$0xff]
    %v288 = vld [vmem:[%s0 + $0x5b4] sm:$0xf]
    %v289 = vld [vmem:[%s0 + $0x5b8] sm:$0xff]
    %v290 = vld [vmem:[%s0 + $0x5c0] sm:$0xf]
    %v291 = vld [vmem:[%s0 + $0x5c4] sm:$0xff]
    %v292 = vld [vmem:[%s0 + $0x5cc] sm:$0xf]
    %v293 = vld [vmem:[%s0 + $0x5d0] sm:$0xff]
    %v294 = vld [vmem:[%s0 + $0x5d8] sm:$0xf]
    %v295 = vld [vmem:[%s0 + $0x5dc] sm:$0xff]
    %v296 = vld [vmem:[%s0 + $0x5e4] sm:$0xf]
    %v297 = vld [vmem:[%s0 + $0x5e8] sm:$0xff]
    %v298 = vld [vmem:[%s0 + $0x5f0] sm:$0xf]
    %v299 = vld [vmem:[%s0 + $0x5f4] sm:$0xff]
    %v300 = vld [vmem:[%s0 + $0x5fc] sm:$0xf]
    %v301 = vld [vmem:[%s0 + $0x600] sm:$0xff]
    %v302 = vld [vmem:[%s0 + $0x608] sm:$0xf]
    %v303 = vld [vmem:[%s0 + $0x60c] sm:$0xff]
    %v304 = vld [vmem:[%s0 + $0x614] sm:$0xf]
    %v305 = vld [vmem:[%s0 + $0x618] sm:$0xff]
    %v306 = vld [vmem:[%s0 + $0x620] sm:$0xf]
    %v307 = vld [vmem:[%s0 + $0x624] sm:$0xff]
    %v308 = vld [vmem:[%s0 + $0x62c] sm:$0xf]
    %v309 = vld [vmem:[%s0 + $0x630] sm:$0xff]
    %v310 = vld [vmem:[%s0 + $0x638] sm:$0xf]
    %v311 = vld [vmem:[%s0 + $0x63c] sm:$0xff]
    %v312 = vld [vmem:[%s0 + $0x644] sm:$0xf]
    %v313 = vld [vmem:[%s0 + $0x648] sm:$0xff]
    %v314 = vld [vmem:[%s0 + $0x650] sm:$0xf]
    %v315 = vld [vmem:[%s0 + $0x654] sm:$0xff]
    %v316 = vld [vmem:[%s0 + $0x65c] sm:$0xf]
    %v317 = vld [vmem:[%s0 + $0x660] sm:$0xff]
    %v318 = vld [vmem:[%s0 + $0x668] sm:$0xf]
    %v319 = vld [vmem:[%s0 + $0x66c] sm:$0xff]
    %v320 = vld [vmem:[%s0 + $0x674] sm:$0xf]
    %v321 = vld [vmem:[%s0 + $0x678] sm:$0xff]
    %v322 = vld [vmem:[%s0 + $0x680] sm:$0xf]
    %v323 = vld [vmem:[%s0 + $0x684] sm:$0xff]
    %v324 = vld [vmem:[%s0 + $0x68c] sm:$0xf]
    %v325 = vld [vmem:[%s0 + $0x690] sm:$0xff]
    %v326 = vld [vmem:[%s0 + $0x698] sm:$0xf]
    %v327 = vld [vmem:[%s0 + $0x69c] sm:$0xff]
    %v328 = vld [vmem:[%s0 + $0x6a4] sm:$0xf]
    %v329 = vld [vmem:[%s0 + $0x6a8] sm:$0xff]
    %v330 = vld [vmem:[%s0 + $0x6b0] sm:$0xf]
    %v331 = vld [vmem:[%s0 + $0x6b4] sm:$0xff]
    %v332 = vld [vmem:[%s0 + $0x6bc] sm:$0xf]
    %v333 = vld [vmem:[%s0 + $0x6c0] sm:$0xff]
    %v334 = vld [vmem:[%s0 + $0x6c8] sm:$0xf]
    %v335 = vld [vmem:[%s0 + $0x6cc] sm:$0xff]
    %v336 = vld [vmem:[%s0 + $0x6d4] sm:$0xf]
    %v337 = vld [vmem:[%s0 + $0x6d8] sm:$0xff]
    %v338 = vld [vmem:[%s0 + $0x6e0] sm:$0xf]
    %v339 = vld [vmem:[%s0 + $0x6e4] sm:$0xff]
    %v340 = vld [vmem:[%s0 + $0x6ec] sm:$0xf]
    %v341 = vld [vmem:[%s0 + $0x6f0] sm:$0xff]
    %v342 = vld [vmem:[%s0 + $0x6f8] sm:$0xf]
    %v343 = vld [vmem:[%s0 + $0x6fc] sm:$0xff]
    %v344 = vld [vmem:[%s0 + $0x704] sm:$0xf]
    %v345 = vld [vmem:[%s0 + $0x708] sm:$0xff]
    %v346 = vld [vmem:[%s0 + $0x710] sm:$0xf]
    %v347 = vld [vmem:[%s0 + $0x714] sm:$0xff]
    %v348 = vld [vmem:[%s0 + $0x71c] sm:$0xf]
    %v349 = vld [vmem:[%s0 + $0x720] sm:$0xff]
    %v350 = vld [vmem:[%s0 + $0x728] sm:$0xf]
    %v351 = vld [vmem:[%s0 + $0x72c] sm:$0xff]
    %v352 = vld [vmem:[%s0 + $0x734] sm:$0xf]
    %v353 = vld [vmem:[%s0 + $0x738] sm:$0xff]
    %v354 = vld [vmem:[%s0 + $0x740] sm:$0xf]
    %v355 = vld [vmem:[%s0 + $0x744] sm:$0xff]
    %v356 = vld [vmem:[%s0 + $0x74c] sm:$0xf]
    %v357 = vld [vmem:[%s0 + $0x750] sm:$0xff]
    %v358 = vld [vmem:[%s0 + $0x758] sm:$0xf]
    %v359 = vld [vmem:[%s0 + $0x75c] sm:$0xff]
    %v360 = vld [vmem:[%s0 + $0x764] sm:$0xf]
    %v361 = vld [vmem:[%s0 + $0x768] sm:$0xff]
    %v362 = vld [vmem:[%s0 + $0x770] sm:$0xf]
    %v363 = vld [vmem:[%s0 + $0x774] sm:$0xff]
    %v364 = vld [vmem:[%s0 + $0x77c] sm:$0xf]
    %v365 = vld [vmem:[%s0 + $0x780] sm:$0xff]
    %v366 = vld [vmem:[%s0 + $0x788] sm:$0xf]
    %v367 = vld [vmem:[%s0 + $0x78c] sm:$0xff]
    %v368 = vld [vmem:[%s0 + $0x794] sm:$0xf]
    %v369 = vld [vmem:[%s0 + $0x798] sm:$0xff]
    %v370 = vld [vmem:[%s0 + $0x7a0] sm:$0xf]
    %v371 = vld [vmem:[%s0 + $0x7a4] sm:$0xff]
    %v372 = vld [vmem:[%s0 + $0x7ac] sm:$0xf]
    %v373 = vld [vmem:[%s0 + $0x7b0] sm:$0xff]
    %v374 = vld [vmem:[%s0 + $0x7b8] sm:$0xf]
    %v375 = vld [vmem:[%s0 + $0x7bc] sm:$0xff]
    %v376 = vld [vmem:[%s0 + $0x7c4] sm:$0xf]
    %v377 = vld [vmem:[%s0 + $0x7c8] sm:$0xff]
    %v378 = vld [vmem:[%s0 + $0x7d0] sm:$0xf]
    %v379 = vld [vmem:[%s0 + $0x7d4] sm:$0xff]
    %v380 = vld [vmem:[%s0 + $0x7dc] sm:$0xf]
    %v381 = vld [vmem:[%s0 + $0x7e0] sm:$0xff]
    %v382 = vld [vmem:[%s0 + $0x7e8] sm:$0xf]
    %v383 = vld [vmem:[%s0 + $0x7ec] sm:$0xff]
    %v384 = vld [vmem:[%s0 + $0x7f4] sm:$0xf]
    %v385 = vld [vmem:[%s0 + $0x7f8] sm:$0xff]
    %v386 = vld [vmem:[%s0 + $0x800] sm:$0xf]
    %v387 = vld [vmem:[%s0 + $0x804] sm:$0xff]
    %v388 = vld [vmem:[%s0 + $0x80c] sm:$0xf]
    %v389 = vld [vmem:[%s0 + $0x810] sm:$0xff]
    %v390 = vld [vmem:[%s0 + $0x818] sm:$0xf]
    %v391 = vld [vmem:[%s0 + $0x81c] sm:$0xff]
    %v392 = vld [vmem:[%s0 + $0x824] sm:$0xf]
    %v393 = vld [vmem:[%s0 + $0x828] sm:$0xff]
    %v394 = vld [vmem:[%s0 + $0x830] sm:$0xf]
    %v395 = vld [vmem:[%s0 + $0x834] sm:$0xff]
    %v396 = vld [vmem:[%s0 + $0x83c] sm:$0xf]
    %v397 = vld [vmem:[%s0 + $0x840] sm:$0xff]
    %v398 = vld [vmem:[%s0 + $0x848] sm:$0xf]
    %v399 = vld [vmem:[%s0 + $0x84c] sm:$0xff]
    %v400 = vld [vmem:[%s0 + $0x854] sm:$0xf]
    %v401 = vld [vmem:[%s0 + $0x858] sm:$0xff]
    %v402 = vld [vmem:[%s0 + $0x860] sm:$0xf]
    %v403 = vld [vmem:[%s0 + $0x864] sm:$0xff]
    %v404 = vld [vmem:[%s0 + $0x86c] sm:$0xf]
    %v405 = vld [vmem:[%s0 + $0x870] sm:$0xff]
    %v406 = vld [vmem:[%s0 + $0x878] sm:$0xf]
    %v407 = vld [vmem:[%s0 + $0x87c] sm:$0xff]
    %v408 = vld [vmem:[%s0 + $0x884] sm:$0xf]
    %v409 = vld [vmem:[%s0 + $0x888] sm:$0xff]
    %v410 = vld [vmem:[%s0 + $0x890] sm:$0xf]
    %v411 = vld [vmem:[%s0 + $0x894] sm:$0xff]
    %v412 = vld [vmem:[%s0 + $0x89c] sm:$0xf]
    %v413 = vld [vmem:[%s0 + $0x8a0] sm:$0xff]
    %v414 = vld [vmem:[%s0 + $0x8a8] sm:$0xf]
    %v415 = vld [vmem:[%s0 + $0x8ac] sm:$0xff]
    %v416 = vld [vmem:[%s0 + $0x8b4] sm:$0xf]
    %v417 = vld [vmem:[%s0 + $0x8b8] sm:$0xff]
    %v418 = vld [vmem:[%s0 + $0x8c0] sm:$0xf]
    %v419 = vld [vmem:[%s0 + $0x8c4] sm:$0xff]
    %v420 = vld [vmem:[%s0 + $0x8cc] sm:$0xf]
    %v421 = vld [vmem:[%s0 + $0x8d0] sm:$0xff]
    %v422 = vld [vmem:[%s0 + $0x8d8] sm:$0xf]
    %v423 = vld [vmem:[%s0 + $0x8dc] sm:$0xff]
    %v424 = vld [vmem:[%s0 + $0x8e4] sm:$0xf]
    %v425 = vld [vmem:[%s0 + $0x8e8] sm:$0xff]
    %v426 = vld [vmem:[%s0 + $0x8f0] sm:$0xf]
    %v427 = vld [vmem:[%s0 + $0x8f4] sm:$0xff]
    %v428 = vld [vmem:[%s0 + $0x8fc] sm:$0xf]
    %v429 = vld [vmem:[%s0 + $0x900] sm:$0xff]
    %v430 = vld [vmem:[%s0 + $0x908] sm:$0xf]
    %v431 = vld [vmem:[%s0 + $0x90c] sm:$0xff]
    %v432 = vld [vmem:[%s0 + $0x914] sm:$0xf]
    %v433 = vld [vmem:[%s0 + $0x918] sm:$0xff]
    %v434 = vld [vmem:[%s0 + $0x920] sm:$0xf]
    %v435 = vld [vmem:[%s0 + $0x924] sm:$0xff]
    %v436 = vld [vmem:[%s0 + $0x92c] sm:$0xf]
    %v437 = vld [vmem:[%s0 + $0x930] sm:$0xff]
    %v438 = vld [vmem:[%s0 + $0x938] sm:$0xf]
    %v439 = vld [vmem:[%s0 + $0x93c] sm:$0xff]
    %v440 = vld [vmem:[%s0 + $0x944] sm:$0xf]
    %v441 = vld [vmem:[%s0 + $0x948] sm:$0xff]
    %v442 = vld [vmem:[%s0 + $0x950] sm:$0xf]
    %v443 = vld [vmem:[%s0 + $0x954] sm:$0xff]
    %v444 = vld [vmem:[%s0 + $0x95c] sm:$0xf]
    %v445 = vld [vmem:[%s0 + $0x960] sm:$0xff]
    %v446 = vld [vmem:[%s0 + $0x968] sm:$0xf]
    %v447 = vld [vmem:[%s0 + $0x96c] sm:$0xff]
    %v448 = vld [vmem:[%s0 + $0x974] sm:$0xf]
    %v449 = vld [vmem:[%s0 + $0x978] sm:$0xff]
    %v450 = vld [vmem:[%s0 + $0x980] sm:$0xf]
    %v451 = vld [vmem:[%s0 + $0x984] sm:$0xff]
    %v452 = vld [vmem:[%s0 + $0x98c] sm:$0xf]
    %v453 = vld [vmem:[%s0 + $0x990] sm:$0xff]
    %v454 = vld [vmem:[%s0 + $0x998] sm:$0xf]
    %v455 = vld [vmem:[%s0 + $0x99c] sm:$0xff]
    %v456 = vld [vmem:[%s0 + $0x9a4] sm:$0xf]
    %v457 = vld [vmem:[%s0 + $0x9a8] sm:$0xff]
    %v458 = vld [vmem:[%s0 + $0x9b0] sm:$0xf]
    %v459 = vld [vmem:[%s0 + $0x9b4] sm:$0xff]
    %v460 = vld [vmem:[%s0 + $0x9bc] sm:$0xf]
    %v461 = vld [vmem:[%s0 + $0x9c0] sm:$0xff]
    %v462 = vld [vmem:[%s0 + $0x9c8] sm:$0xf]
    %v463 = vld [vmem:[%s0 + $0x9cc] sm:$0xff]
    %v464 = vld [vmem:[%s0 + $0x9d4] sm:$0xf]
    %v465 = vld [vmem:[%s0 + $0x9d8] sm:$0xff]
    %v466 = vld [vmem:[%s0 + $0x9e0] sm:$0xf]
    %v467 = vld [vmem:[%s0 + $0x9e4] sm:$0xff]
    %v468 = vld [vmem:[%s0 + $0x9ec] sm:$0xf]
    %v469 = vld [vmem:[%s0 + $0x9f0] sm:$0xff]
    %v470 = vld [vmem:[%s0 + $0x9f8] sm:$0xf]
    %v471 = vld [vmem:[%s0 + $0x9fc] sm:$0xff]
    %v472 = vld [vmem:[%s0 + $0xa04] sm:$0xf]
    %v473 = vld [vmem:[%s0 + $0xa08] sm:$0xff]
    %v474 = vld [vmem:[%s0 + $0xa10] sm:$0xf]
    %v475 = vld [vmem:[%s0 + $0xa14] sm:$0xff]
    %v476 = vld [vmem:[%s0 + $0xa1c] sm:$0xf]
    %v477 = vld [vmem:[%s0 + $0xa20] sm:$0xff]
    %v478 = vld [vmem:[%s0 + $0xa28] sm:$0xf]
    %v479 = vld [vmem:[%s0 + $0xa2c] sm:$0xff]
    %v480 = vld [vmem:[%s0 + $0xa34] sm:$0xf]
    %v481 = vld [vmem:[%s0 + $0xa38] sm:$0xff]
    %v482 = vld [vmem:[%s0 + $0xa40] sm:$0xf]
    %v483 = vld [vmem:[%s0 + $0xa44] sm:$0xff]
    %v484 = vld [vmem:[%s0 + $0xa4c] sm:$0xf]
    %v485 = vld [vmem:[%s0 + $0xa50] sm:$0xff]
    %v486 = vld [vmem:[%s0 + $0xa58] sm:$0xf]
    %v487 = vld [vmem:[%s0 + $0xa5c] sm:$0xff]
    %v488 = vld [vmem:[%s0 + $0xa64] sm:$0xf]
    %v489 = vld [vmem:[%s0 + $0xa68] sm:$0xff]
    %v490 = vld [vmem:[%s0 + $0xa70] sm:$0xf]
    %v491 = vld [vmem:[%s0 + $0xa74] sm:$0xff]
    %v492 = vld [vmem:[%s0 + $0xa7c] sm:$0xf]
    %v493 = vld [vmem:[%s0 + $0xa80] sm:$0xff]
    %v494 = vld [vmem:[%s0 + $0xa88] sm:$0xf]
    %v495 = vld [vmem:[%s0 + $0xa8c] sm:$0xff]
    %v496 = vld [vmem:[%s0 + $0xa94] sm:$0xf]
    %v497 = vld [vmem:[%s0 + $0xa98] sm:$0xff]
    %v498 = vld [vmem:[%s0 + $0xaa0] sm:$0xf]
    %v499 = vld [vmem:[%s0 + $0xaa4] sm:$0xff]
    %v500 = vld [vmem:[%s0 + $0xaac] sm:$0xf]
    %v501 = vld [vmem:[%s0 + $0xab0] sm:$0xff]
    %v502 = vld [vmem:[%s0 + $0xab8] sm:$0xf]
    %v503 = vld [vmem:[%s0 + $0xabc] sm:$0xff]
    %v504 = vld [vmem:[%s0 + $0xac4] sm:$0xf]
    %v505 = vld [vmem:[%s0 + $0xac8] sm:$0xff]
    %v506 = vld [vmem:[%s0 + $0xad0] sm:$0xf]
    %v507 = vld [vmem:[%s0 + $0xad4] sm:$0xff]
    %v508 = vld [vmem:[%s0 + $0xadc] sm:$0xf]
    %v509 = vld [vmem:[%s0 + $0xae0] sm:$0xff]
    %v510 = vld [vmem:[%s0 + $0xae8] sm:$0xf]
    %v511 = vld [vmem:[%s0 + $0xaec] sm:$0xff]
    %v512 = vld [vmem:[%s0 + $0xaf4] sm:$0xf]
    %v513 = vld [vmem:[%s0 + $0xaf8] sm:$0xff]
    %v514 = vld [vmem:[%s0 + $0xb00] sm:$0xf]
    %v515 = vld [vmem:[%s0 + $0xb04] sm:$0xff]
    %v516 = vld [vmem:[%s0 + $0xb0c] sm:$0xf]
    %v517 = vld [vmem:[%s0 + $0xb10] sm:$0xff]
    %v518 = vld [vmem:[%s0 + $0xb18] sm:$0xf]
    %v519 = vld [vmem:[%s0 + $0xb1c] sm:$0xff]
    %v520 = vld [vmem:[%s0 + $0xb24] sm:$0xf]
    %v521 = vld [vmem:[%s0 + $0xb28] sm:$0xff]
    %v522 = vld [vmem:[%s0 + $0xb30] sm:$0xf]
    %v523 = vld [vmem:[%s0 + $0xb34] sm:$0xff]
    %v524 = vld [vmem:[%s0 + $0xb3c] sm:$0xf]
    %v525 = vld [vmem:[%s0 + $0xb40] sm:$0xff]
    %v526 = vld [vmem:[%s0 + $0xb48] sm:$0xf]
    %v527 = vld [vmem:[%s0 + $0xb4c] sm:$0xff]
    %v528 = vld [vmem:[%s0 + $0xb54] sm:$0xf]
    %v529 = vld [vmem:[%s0 + $0xb58] sm:$0xff]
    %v530 = vld [vmem:[%s0 + $0xb60] sm:$0xf]
    %v531 = vld [vmem:[%s0 + $0xb64] sm:$0xff]
    %v532 = vld [vmem:[%s0 + $0xb6c] sm:$0xf]
    %v533 = vld [vmem:[%s0 + $0xb70] sm:$0xff]
    %v534 = vld [vmem:[%s0 + $0xb78] sm:$0xf]
    %v535 = vld [vmem:[%s0 + $0xb7c] sm:$0xff]
    %v536 = vld [vmem:[%s0 + $0xb84] sm:$0xf]
    %v537 = vld [vmem:[%s0 + $0xb88] sm:$0xff]
    %v538 = vld [vmem:[%s0 + $0xb90] sm:$0xf]
    %v539 = vld [vmem:[%s0 + $0xb94] sm:$0xff]
    %v540 = vld [vmem:[%s0 + $0xb9c] sm:$0xf]
    %v541 = vld [vmem:[%s0 + $0xba0] sm:$0xff]
    %v542 = vld [vmem:[%s0 + $0xba8] sm:$0xf]
    %v543 = vld [vmem:[%s0 + $0xbac] sm:$0xff]
    %v544 = vld [vmem:[%s0 + $0xbb4] sm:$0xf]
    %v545 = vld [vmem:[%s0 + $0xbb8] sm:$0xff]
    %v546 = vld [vmem:[%s0 + $0xbc0] sm:$0xf]
    %v547 = vld [vmem:[%s0 + $0xbc4] sm:$0xff]
    %v548 = vld [vmem:[%s0 + $0xbcc] sm:$0xf]
    %v549 = vld [vmem:[%s0 + $0xbd0] sm:$0xff]
    %v550 = vld [vmem:[%s0 + $0xbd8] sm:$0xf]
    %v551 = vld [vmem:[%s0 + $0xbdc] sm:$0xff]
    %v552 = vld [vmem:[%s0 + $0xbe4] sm:$0xf]
    %v553 = vld [vmem:[%s0 + $0xbe8] sm:$0xff]
    %v554 = vld [vmem:[%s0 + $0xbf0] sm:$0xf]
    %v555 = vld [vmem:[%s0 + $0xbf4] sm:$0xff]
    %v556 = vld [vmem:[%s0 + $0xbfc] sm:$0xf]
    %s557 = sld [smem:[#allocation2]]
    %v558 = vstv %s557
    %v567 = vunpack.c.l.b16 %v37
    %v568 = vunpack.c.h.b16 %v37
    %v569 = vunpack.c.l.b16 %v38
    %v570 = vunpack.c.h.b16 %v38
    %v571 = vunpack.c.l.b16 %v39
    %v572 = vunpack.c.h.b16 %v39
    %v573 = vunpack.c.l.b16 %v40
    %v574 = vunpack.c.h.b16 %v40
    %v575 = vunpack.c.l.b16 %v41
    %v576 = vunpack.c.h.b16 %v41
    %v577 = vunpack.c.l.b16 %v42
    %v578 = vunpack.c.h.b16 %v42
    %v579 = vunpack.c.l.b16 %v43
    %v580 = vunpack.c.h.b16 %v43
    %v581 = vunpack.c.l.b16 %v44
    %v582 = vunpack.c.h.b16 %v44
    %v583 = vpack.c.b16 %v567, %v567
    %v584 = vpack.c.b16 %v568, %v568
    %v585 = vpack.c.b16 %v569, %v569
    %v586 = vpack.c.b16 %v570, %v570
    %v587 = vpack.c.b16 %v571, %v571
    %v588 = vpack.c.b16 %v572, %v572
    %v589 = vpack.c.b16 %v573, %v573
    %v590 = vpack.c.b16 %v574, %v574
    %v591 = vpack.c.b16 %v575, %v575
    %v592 = vpack.c.b16 %v576, %v576
    %v593 = vpack.c.b16 %v577, %v577
    %v594 = vpack.c.b16 %v578, %v578
    %v595 = vpack.c.b16 %v579, %v579
    %v596 = vpack.c.b16 %v580, %v580
    %v597 = vpack.c.b16 %v581, %v581
    %v598 = vpack.c.b16 %v582, %v582
    %v1127 = vunpack.c.l.b16 %v45
    %v1128 = vunpack.c.h.b16 %v45
    %v1129 = vunpack.c.l.b16 %v46
    %v1130 = vunpack.c.l.b16 %v47
    %v1131 = vunpack.c.h.b16 %v47
    %v1132 = vunpack.c.l.b16 %v48
    %v1133 = vunpack.c.l.b16 %v49
    %v1134 = vunpack.c.h.b16 %v49
    %v1135 = vunpack.c.l.b16 %v50
    %v1136 = vunpack.c.l.b16 %v51
    %v1137 = vunpack.c.h.b16 %v51
    %v1138 = vunpack.c.l.b16 %v52
    %v1139 = vunpack.c.l.b16 %v53
    %v1140 = vunpack.c.h.b16 %v53
    %v1141 = vunpack.c.l.b16 %v54
    %v1142 = vunpack.c.l.b16 %v55
    %v1143 = vunpack.c.h.b16 %v55
    %v1144 = vunpack.c.l.b16 %v56
    %v1145 = vunpack.c.l.b16 %v57
    %v1146 = vunpack.c.h.b16 %v57
    %v1147 = vunpack.c.l.b16 %v58
    %v1148 = vunpack.c.l.b16 %v59
    %v1149 = vunpack.c.h.b16 %v59
    %v1150 = vunpack.c.l.b16 %v60
    %v1151 = vunpack.c.l.b16 %v61
    %v1152 = vunpack.c.h.b16 %v61
    %v1153 = vunpack.c.l.b16 %v62
    %v1154 = vunpack.c.l.b16 %v63
    %v1155 = vunpack.c.h.b16 %v63
    %v1156 = vunpack.c.l.b16 %v64
    %v1157 = vunpack.c.l.b16 %v65
    %v1158 = vunpack.c.h.b16 %v65
    %v1159 = vunpack.c.l.b16 %v66
    %v1160 = vunpack.c.l.b16 %v67
    %v1161 = vunpack.c.h.b16 %v67
    %v1162 = vunpack.c.l.b16 %v68
    %v1163 = vunpack.c.l.b16 %v69
    %v1164 = vunpack.c.h.b16 %v69
    %v1165 = vunpack.c.l.b16 %v70
    %v1166 = vunpack.c.l.b16 %v71
    %v1167 = vunpack.c.h.b16 %v71
    %v1168 = vunpack.c.l.b16 %v72
    %v1169 = vunpack.c.l.b16 %v73
    %v1170 = vunpack.c.h.b16 %v73
    %v1171 = vunpack.c.l.b16 %v74
    %v1172 = vunpack.c.l.b16 %v75
    %v1173 = vunpack.c.h.b16 %v75
    %v1174 = vunpack.c.l.b16 %v76
    %v1175 = vunpack.c.l.b16 %v77
    %v1176 = vunpack.c.h.b16 %v77
    %v1177 = vunpack.c.l.b16 %v78
    %v1178 = vunpack.c.l.b16 %v79
    %v1179 = vunpack.c.h.b16 %v79
    %v1180 = vunpack.c.l.b16 %v80
    %v1181 = vunpack.c.l.b16 %v81
    %v1182 = vunpack.c.h.b16 %v81
    %v1183 = vunpack.c.l.b16 %v82
    %v1184 = vunpack.c.l.b16 %v83
    %v1185 = vunpack.c.h.b16 %v83
    %v1186 = vunpack.c.l.b16 %v84
    %v1187 = vunpack.c.l.b16 %v85
    %v1188 = vunpack.c.h.b16 %v85
    %v1189 = vunpack.c.l.b16 %v86
    %v1190 = vunpack.c.l.b16 %v87
    %v1191 = vunpack.c.h.b16 %v87
    %v1192 = vunpack.c.l.b16 %v88
    %v1193 = vunpack.c.l.b16 %v89
    %v1194 = vunpack.c.h.b16 %v89
    %v1195 = vunpack.c.l.b16 %v90
    %v1196 = vunpack.c.l.b16 %v91
    %v1197 = vunpack.c.h.b16 %v91
    %v1198 = vunpack.c.l.b16 %v92
    %v1199 = vunpack.c.l.b16 %v93
    %v1200 = vunpack.c.h.b16 %v93
    %v1201 = vunpack.c.l.b16 %v94
    %v1202 = vunpack.c.l.b16 %v95
    %v1203 = vunpack.c.h.b16 %v95
    %v1204 = vunpack.c.l.b16 %v96
    %v1205 = vunpack.c.l.b16 %v97
    %v1206 = vunpack.c.h.b16 %v97
    %v1207 = vunpack.c.l.b16 %v98
    %v1208 = vunpack.c.l.b16 %v99
    %v1209 = vunpack.c.h.b16 %v99
    %v1210 = vunpack.c.l.b16 %v100
    %v1211 = vunpack.c.l.b16 %v101
    %v1212 = vunpack.c.h.b16 %v101
    %v1213 = vunpack.c.l.b16 %v102
    %v1214 = vunpack.c.l.b16 %v103
    %v1215 = vunpack.c.h.b16 %v103
    %v1216 = vunpack.c.l.b16 %v104
    %v1217 = vunpack.c.l.b16 %v105
    %v1218 = vunpack.c.h.b16 %v105
    %v1219 = vunpack.c.l.b16 %v106
    %v1220 = vunpack.c.l.b16 %v107
    %v1221 = vunpack.c.h.b16 %v107
    %v1222 = vunpack.c.l.b16 %v108
    %v1223 = vunpack.c.l.b16 %v109
    %v1224 = vunpack.c.h.b16 %v109
    %v1225 = vunpack.c.l.b16 %v110
    %v1226 = vunpack.c.l.b16 %v111
    %v1227 = vunpack.c.h.b16 %v111
    %v1228 = vunpack.c.l.b16 %v112
    %v1229 = vunpack.c.l.b16 %v113
    %v1230 = vunpack.c.h.b16 %v113
    %v1231 = vunpack.c.l.b16 %v114
    %v1232 = vunpack.c.l.b16 %v115
    %v1233 = vunpack.c.h.b16 %v115
    %v1234 = vunpack.c.l.b16 %v116
    %v1235 = vunpack.c.l.b16 %v117
    %v1236 = vunpack.c.h.b16 %v117
    %v1237 = vunpack.c.l.b16 %v118
    %v1238 = vunpack.c.l.b16 %v119
    %v1239 = vunpack.c.h.b16 %v119
    %v1240 = vunpack.c.l.b16 %v120
    %v1241 = vunpack.c.l.b16 %v121
    %v1242 = vunpack.c.h.b16 %v121
    %v1243 = vunpack.c.l.b16 %v122
    %v1244 = vunpack.c.l.b16 %v123
    %v1245 = vunpack.c.h.b16 %v123
    %v1246 = vunpack.c.l.b16 %v124
    %v1247 = vunpack.c.l.b16 %v125
    %v1248 = vunpack.c.h.b16 %v125
    %v1249 = vunpack.c.l.b16 %v126
    %v1250 = vunpack.c.l.b16 %v127
    %v1251 = vunpack.c.h.b16 %v127
    %v1252 = vunpack.c.l.b16 %v128
    %v1253 = vunpack.c.l.b16 %v129
    %v1254 = vunpack.c.h.b16 %v129
    %v1255 = vunpack.c.l.b16 %v130
    %v1256 = vunpack.c.l.b16 %v131
    %v1257 = vunpack.c.h.b16 %v131
    %v1258 = vunpack.c.l.b16 %v132
    %v1259 = vunpack.c.l.b16 %v133
    %v1260 = vunpack.c.h.b16 %v133
    %v1261 = vunpack.c.l.b16 %v134
    %v1262 = vunpack.c.l.b16 %v135
    %v1263 = vunpack.c.h.b16 %v135
    %v1264 = vunpack.c.l.b16 %v136
    %v1265 = vunpack.c.l.b16 %v137
    %v1266 = vunpack.c.h.b16 %v137
    %v1267 = vunpack.c.l.b16 %v138
    %v1268 = vunpack.c.l.b16 %v139
    %v1269 = vunpack.c.h.b16 %v139
    %v1270 = vunpack.c.l.b16 %v140
    %v1271 = vunpack.c.l.b16 %v141
    %v1272 = vunpack.c.h.b16 %v141
    %v1273 = vunpack.c.l.b16 %v142
    %v1274 = vunpack.c.l.b16 %v143
    %v1275 = vunpack.c.h.b16 %v143
    %v1276 = vunpack.c.l.b16 %v144
    %v1277 = vunpack.c.l.b16 %v145
    %v1278 = vunpack.c.h.b16 %v145
    %v1279 = vunpack.c.l.b16 %v146
    %v1280 = vunpack.c.l.b16 %v147
    %v1281 = vunpack.c.h.b16 %v147
    %v1282 = vunpack.c.l.b16 %v148
    %v1283 = vunpack.c.l.b16 %v149
    %v1284 = vunpack.c.h.b16 %v149
    %v1285 = vunpack.c.l.b16 %v150
    %v1286 = vunpack.c.l.b16 %v151
    %v1287 = vunpack.c.h.b16 %v151
    %v1288 = vunpack.c.l.b16 %v152
    %v1289 = vunpack.c.l.b16 %v153
    %v1290 = vunpack.c.h.b16 %v153
    %v1291 = vunpack.c.l.b16 %v154
    %v1292 = vunpack.c.l.b16 %v155
    %v1293 = vunpack.c.h.b16 %v155
    %v1294 = vunpack.c.l.b16 %v156
    %v1295 = vunpack.c.l.b16 %v157
    %v1296 = vunpack.c.h.b16 %v157
    %v1297 = vunpack.c.l.b16 %v158
    %v1298 = vunpack.c.l.b16 %v159
    %v1299 = vunpack.c.h.b16 %v159
    %v1300 = vunpack.c.l.b16 %v160
    %v1301 = vunpack.c.l.b16 %v161
    %v1302 = vunpack.c.h.b16 %v161
    %v1303 = vunpack.c.l.b16 %v162
    %v1304 = vunpack.c.l.b16 %v163
    %v1305 = vunpack.c.h.b16 %v163
    %v1306 = vunpack.c.l.b16 %v164
    %v1307 = vunpack.c.l.b16 %v165
    %v1308 = vunpack.c.h.b16 %v165
    %v1309 = vunpack.c.l.b16 %v166
    %v1310 = vunpack.c.l.b16 %v167
    %v1311 = vunpack.c.h.b16 %v167
    %v1312 = vunpack.c.l.b16 %v168
    %v1313 = vunpack.c.l.b16 %v169
    %v1314 = vunpack.c.h.b16 %v169
    %v1315 = vunpack.c.l.b16 %v170
    %v1316 = vunpack.c.l.b16 %v171
    %v1317 = vunpack.c.h.b16 %v171
    %v1318 = vunpack.c.l.b16 %v172
    %v1319 = vunpack.c.l.b16 %v173
    %v1320 = vunpack.c.h.b16 %v173
    %v1321 = vunpack.c.l.b16 %v174
    %v1322 = vunpack.c.l.b16 %v175
    %v1323 = vunpack.c.h.b16 %v175
    %v1324 = vunpack.c.l.b16 %v176
    %v1325 = vunpack.c.l.b16 %v177
    %v1326 = vunpack.c.h.b16 %v177
    %v1327 = vunpack.c.l.b16 %v178
    %v1328 = vunpack.c.l.b16 %v179
    %v1329 = vunpack.c.h.b16 %v179
    %v1330 = vunpack.c.l.b16 %v180
    %v1331 = vunpack.c.l.b16 %v181
    %v1332 = vunpack.c.h.b16 %v181
    %v1333 = vunpack.c.l.b16 %v182
    %v1334 = vunpack.c.l.b16 %v183
    %v1335 = vunpack.c.h.b16 %v183
    %v1336 = vunpack.c.l.b16 %v184
    %v1337 = vunpack.c.l.b16 %v185
    %v1338 = vunpack.c.h.b16 %v185
    %v1339 = vunpack.c.l.b16 %v186
    %v1340 = vunpack.c.l.b16 %v187
    %v1341 = vunpack.c.h.b16 %v187
    %v1342 = vunpack.c.l.b16 %v188
    %v1343 = vunpack.c.l.b16 %v189
    %v1344 = vunpack.c.h.b16 %v189
    %v1345 = vunpack.c.l.b16 %v190
    %v1346 = vunpack.c.l.b16 %v191
    %v1347 = vunpack.c.h.b16 %v191
    %v1348 = vunpack.c.l.b16 %v192
    %v1349 = vunpack.c.l.b16 %v193
    %v1350 = vunpack.c.h.b16 %v193
    %v1351 = vunpack.c.l.b16 %v194
    %v1352 = vunpack.c.l.b16 %v195
    %v1353 = vunpack.c.h.b16 %v195
    %v1354 = vunpack.c.l.b16 %v196
    %v1355 = vunpack.c.l.b16 %v197
    %v1356 = vunpack.c.h.b16 %v197
    %v1357 = vunpack.c.l.b16 %v198
    %v1358 = vunpack.c.l.b16 %v199
    %v1359 = vunpack.c.h.b16 %v199
    %v1360 = vunpack.c.l.b16 %v200
    %v1361 = vunpack.c.l.b16 %v201
    %v1362 = vunpack.c.h.b16 %v201
    %v1363 = vunpack.c.l.b16 %v202
    %v1364 = vunpack.c.l.b16 %v203
    %v1365 = vunpack.c.h.b16 %v203
    %v1366 = vunpack.c.l.b16 %v204
    %v1367 = vunpack.c.l.b16 %v205
    %v1368 = vunpack.c.h.b16 %v205
    %v1369 = vunpack.c.l.b16 %v206
    %v1370 = vunpack.c.l.b16 %v207
    %v1371 = vunpack.c.h.b16 %v207
    %v1372 = vunpack.c.l.b16 %v208
    %v1373 = vunpack.c.l.b16 %v209
    %v1374 = vunpack.c.h.b16 %v209
    %v1375 = vunpack.c.l.b16 %v210
    %v1376 = vunpack.c.l.b16 %v211
    %v1377 = vunpack.c.h.b16 %v211
    %v1378 = vunpack.c.l.b16 %v212
    %v1379 = vunpack.c.l.b16 %v213
    %v1380 = vunpack.c.h.b16 %v213
    %v1381 = vunpack.c.l.b16 %v214
    %v1382 = vunpack.c.l.b16 %v215
    %v1383 = vunpack.c.h.b16 %v215
    %v1384 = vunpack.c.l.b16 %v216
    %v1385 = vunpack.c.l.b16 %v217
    %v1386 = vunpack.c.h.b16 %v217
    %v1387 = vunpack.c.l.b16 %v218
    %v1388 = vunpack.c.l.b16 %v219
    %v1389 = vunpack.c.h.b16 %v219
    %v1390 = vunpack.c.l.b16 %v220
    %v1391 = vunpack.c.l.b16 %v221
    %v1392 = vunpack.c.h.b16 %v221
    %v1393 = vunpack.c.l.b16 %v222
    %v1394 = vunpack.c.l.b16 %v223
    %v1395 = vunpack.c.h.b16 %v223
    %v1396 = vunpack.c.l.b16 %v224
    %v1397 = vunpack.c.l.b16 %v225
    %v1398 = vunpack.c.h.b16 %v225
    %v1399 = vunpack.c.l.b16 %v226
    %v1400 = vunpack.c.l.b16 %v227
    %v1401 = vunpack.c.h.b16 %v227
    %v1402 = vunpack.c.l.b16 %v228
    %v1403 = vunpack.c.l.b16 %v229
    %v1404 = vunpack.c.h.b16 %v229
    %v1405 = vunpack.c.l.b16 %v230
    %v1406 = vunpack.c.l.b16 %v231
    %v1407 = vunpack.c.h.b16 %v231
    %v1408 = vunpack.c.l.b16 %v232
    %v1409 = vunpack.c.l.b16 %v233
    %v1410 = vunpack.c.h.b16 %v233
    %v1411 = vunpack.c.l.b16 %v234
    %v1412 = vunpack.c.l.b16 %v235
    %v1413 = vunpack.c.h.b16 %v235
    %v1414 = vunpack.c.l.b16 %v236
    %v1415 = vunpack.c.l.b16 %v237
    %v1416 = vunpack.c.h.b16 %v237
    %v1417 = vunpack.c.l.b16 %v238
    %v1418 = vunpack.c.l.b16 %v239
    %v1419 = vunpack.c.h.b16 %v239
    %v1420 = vunpack.c.l.b16 %v240
    %v1421 = vunpack.c.l.b16 %v241
    %v1422 = vunpack.c.h.b16 %v241
    %v1423 = vunpack.c.l.b16 %v242
    %v1424 = vunpack.c.l.b16 %v243
    %v1425 = vunpack.c.h.b16 %v243
    %v1426 = vunpack.c.l.b16 %v244
    %v1427 = vunpack.c.l.b16 %v245
    %v1428 = vunpack.c.h.b16 %v245
    %v1429 = vunpack.c.l.b16 %v246
    %v1430 = vunpack.c.l.b16 %v247
    %v1431 = vunpack.c.h.b16 %v247
    %v1432 = vunpack.c.l.b16 %v248
    %v1433 = vunpack.c.l.b16 %v249
    %v1434 = vunpack.c.h.b16 %v249
    %v1435 = vunpack.c.l.b16 %v250
    %v1436 = vunpack.c.l.b16 %v251
    %v1437 = vunpack.c.h.b16 %v251
    %v1438 = vunpack.c.l.b16 %v252
    %v1439 = vunpack.c.l.b16 %v253
    %v1440 = vunpack.c.h.b16 %v253
    %v1441 = vunpack.c.l.b16 %v254
    %v1442 = vunpack.c.l.b16 %v255
    %v1443 = vunpack.c.h.b16 %v255
    %v1444 = vunpack.c.l.b16 %v256
    %v1445 = vunpack.c.l.b16 %v257
    %v1446 = vunpack.c.h.b16 %v257
    %v1447 = vunpack.c.l.b16 %v258
    %v1448 = vunpack.c.l.b16 %v259
    %v1449 = vunpack.c.h.b16 %v259
    %v1450 = vunpack.c.l.b16 %v260
    %v1451 = vunpack.c.l.b16 %v261
    %v1452 = vunpack.c.h.b16 %v261
    %v1453 = vunpack.c.l.b16 %v262
    %v1454 = vunpack.c.l.b16 %v263
    %v1455 = vunpack.c.h.b16 %v263
    %v1456 = vunpack.c.l.b16 %v264
    %v1457 = vunpack.c.l.b16 %v265
    %v1458 = vunpack.c.h.b16 %v265
    %v1459 = vunpack.c.l.b16 %v266
    %v1460 = vunpack.c.l.b16 %v267
    %v1461 = vunpack.c.h.b16 %v267
    %v1462 = vunpack.c.l.b16 %v268
    %v1463 = vunpack.c.l.b16 %v269
    %v1464 = vunpack.c.h.b16 %v269
    %v1465 = vunpack.c.l.b16 %v270
    %v1466 = vunpack.c.l.b16 %v271
    %v1467 = vunpack.c.h.b16 %v271
    %v1468 = vunpack.c.l.b16 %v272
    %v1469 = vunpack.c.l.b16 %v273
    %v1470 = vunpack.c.h.b16 %v273
    %v1471 = vunpack.c.l.b16 %v274
    %v1472 = vunpack.c.l.b16 %v275
    %v1473 = vunpack.c.h.b16 %v275
    %v1474 = vunpack.c.l.b16 %v276
    %v1475 = vunpack.c.l.b16 %v277
    %v1476 = vunpack.c.h.b16 %v277
    %v1477 = vunpack.c.l.b16 %v278
    %v1478 = vunpack.c.l.b16 %v279
    %v1479 = vunpack.c.h.b16 %v279
    %v1480 = vunpack.c.l.b16 %v280
    %v1481 = vunpack.c.l.b16 %v281
    %v1482 = vunpack.c.h.b16 %v281
    %v1483 = vunpack.c.l.b16 %v282
    %v1484 = vunpack.c.l.b16 %v283
    %v1485 = vunpack.c.h.b16 %v283
    %v1486 = vunpack.c.l.b16 %v284
    %v1487 = vunpack.c.l.b16 %v285
    %v1488 = vunpack.c.h.b16 %v285
    %v1489 = vunpack.c.l.b16 %v286
    %v1490 = vunpack.c.l.b16 %v287
    %v1491 = vunpack.c.h.b16 %v287
    %v1492 = vunpack.c.l.b16 %v288
    %v1493 = vunpack.c.l.b16 %v289
    %v1494 = vunpack.c.h.b16 %v289
    %v1495 = vunpack.c.l.b16 %v290
    %v1496 = vunpack.c.l.b16 %v291
    %v1497 = vunpack.c.h.b16 %v291
    %v1498 = vunpack.c.l.b16 %v292
    %v1499 = vunpack.c.l.b16 %v293
    %v1500 = vunpack.c.h.b16 %v293
    %v1501 = vunpack.c.l.b16 %v294
    %v1502 = vunpack.c.l.b16 %v295
    %v1503 = vunpack.c.h.b16 %v295
    %v1504 = vunpack.c.l.b16 %v296
    %v1505 = vunpack.c.l.b16 %v297
    %v1506 = vunpack.c.h.b16 %v297
    %v1507 = vunpack.c.l.b16 %v298
    %v1508 = vunpack.c.l.b16 %v299
    %v1509 = vunpack.c.h.b16 %v299
    %v1510 = vunpack.c.l.b16 %v300
    %v1511 = vunpack.c.l.b16 %v301
    %v1512 = vunpack.c.h.b16 %v301
    %v1513 = vunpack.c.l.b16 %v302
    %v1514 = vunpack.c.l.b16 %v303
    %v1515 = vunpack.c.h.b16 %v303
    %v1516 = vunpack.c.l.b16 %v304
    %v1517 = vunpack.c.l.b16 %v305
    %v1518 = vunpack.c.h.b16 %v305
    %v1519 = vunpack.c.l.b16 %v306
    %v1520 = vunpack.c.l.b16 %v307
    %v1521 = vunpack.c.h.b16 %v307
    %v1522 = vunpack.c.l.b16 %v308
    %v1523 = vunpack.c.l.b16 %v309
    %v1524 = vunpack.c.h.b16 %v309
    %v1525 = vunpack.c.l.b16 %v310
    %v1526 = vunpack.c.l.b16 %v311
    %v1527 = vunpack.c.h.b16 %v311
    %v1528 = vunpack.c.l.b16 %v312
    %v1529 = vunpack.c.l.b16 %v313
    %v1530 = vunpack.c.h.b16 %v313
    %v1531 = vunpack.c.l.b16 %v314
    %v1532 = vunpack.c.l.b16 %v315
    %v1533 = vunpack.c.h.b16 %v315
    %v1534 = vunpack.c.l.b16 %v316
    %v1535 = vunpack.c.l.b16 %v317
    %v1536 = vunpack.c.h.b16 %v317
    %v1537 = vunpack.c.l.b16 %v318
    %v1538 = vunpack.c.l.b16 %v319
    %v1539 = vunpack.c.h.b16 %v319
    %v1540 = vunpack.c.l.b16 %v320
    %v1541 = vunpack.c.l.b16 %v321
    %v1542 = vunpack.c.h.b16 %v321
    %v1543 = vunpack.c.l.b16 %v322
    %v1544 = vunpack.c.l.b16 %v323
    %v1545 = vunpack.c.h.b16 %v323
    %v1546 = vunpack.c.l.b16 %v324
    %v1547 = vunpack.c.l.b16 %v325
    %v1548 = vunpack.c.h.b16 %v325
    %v1549 = vunpack.c.l.b16 %v326
    %v1550 = vunpack.c.l.b16 %v327
    %v1551 = vunpack.c.h.b16 %v327
    %v1552 = vunpack.c.l.b16 %v328
    %v1553 = vunpack.c.l.b16 %v329
    %v1554 = vunpack.c.h.b16 %v329
    %v1555 = vunpack.c.l.b16 %v330
    %v1556 = vunpack.c.l.b16 %v331
    %v1557 = vunpack.c.h.b16 %v331
    %v1558 = vunpack.c.l.b16 %v332
    %v1559 = vunpack.c.l.b16 %v333
    %v1560 = vunpack.c.h.b16 %v333
    %v1561 = vunpack.c.l.b16 %v334
    %v1562 = vunpack.c.l.b16 %v335
    %v1563 = vunpack.c.h.b16 %v335
    %v1564 = vunpack.c.l.b16 %v336
    %v1565 = vunpack.c.l.b16 %v337
    %v1566 = vunpack.c.h.b16 %v337
    %v1567 = vunpack.c.l.b16 %v338
    %v1568 = vunpack.c.l.b16 %v339
    %v1569 = vunpack.c.h.b16 %v339
    %v1570 = vunpack.c.l.b16 %v340
    %v1571 = vunpack.c.l.b16 %v341
    %v1572 = vunpack.c.h.b16 %v341
    %v1573 = vunpack.c.l.b16 %v342
    %v1574 = vunpack.c.l.b16 %v343
    %v1575 = vunpack.c.h.b16 %v343
    %v1576 = vunpack.c.l.b16 %v344
    %v1577 = vunpack.c.l.b16 %v345
    %v1578 = vunpack.c.h.b16 %v345
    %v1579 = vunpack.c.l.b16 %v346
    %v1580 = vunpack.c.l.b16 %v347
    %v1581 = vunpack.c.h.b16 %v347
    %v1582 = vunpack.c.l.b16 %v348
    %v1583 = vunpack.c.l.b16 %v349
    %v1584 = vunpack.c.h.b16 %v349
    %v1585 = vunpack.c.l.b16 %v350
    %v1586 = vunpack.c.l.b16 %v351
    %v1587 = vunpack.c.h.b16 %v351
    %v1588 = vunpack.c.l.b16 %v352
    %v1589 = vunpack.c.l.b16 %v353
    %v1590 = vunpack.c.h.b16 %v353
    %v1591 = vunpack.c.l.b16 %v354
    %v1592 = vunpack.c.l.b16 %v355
    %v1593 = vunpack.c.h.b16 %v355
    %v1594 = vunpack.c.l.b16 %v356
    %v1595 = vunpack.c.l.b16 %v357
    %v1596 = vunpack.c.h.b16 %v357
    %v1597 = vunpack.c.l.b16 %v358
    %v1598 = vunpack.c.l.b16 %v359
    %v1599 = vunpack.c.h.b16 %v359
    %v1600 = vunpack.c.l.b16 %v360
    %v1601 = vunpack.c.l.b16 %v361
    %v1602 = vunpack.c.h.b16 %v361
    %v1603 = vunpack.c.l.b16 %v362
    %v1604 = vunpack.c.l.b16 %v363
    %v1605 = vunpack.c.h.b16 %v363
    %v1606 = vunpack.c.l.b16 %v364
    %v1607 = vunpack.c.l.b16 %v365
    %v1608 = vunpack.c.h.b16 %v365
    %v1609 = vunpack.c.l.b16 %v366
    %v1610 = vunpack.c.l.b16 %v367
    %v1611 = vunpack.c.h.b16 %v367
    %v1612 = vunpack.c.l.b16 %v368
    %v1613 = vunpack.c.l.b16 %v369
    %v1614 = vunpack.c.h.b16 %v369
    %v1615 = vunpack.c.l.b16 %v370
    %v1616 = vunpack.c.l.b16 %v371
    %v1617 = vunpack.c.h.b16 %v371
    %v1618 = vunpack.c.l.b16 %v372
    %v1619 = vunpack.c.l.b16 %v373
    %v1620 = vunpack.c.h.b16 %v373
    %v1621 = vunpack.c.l.b16 %v374
    %v1622 = vunpack.c.l.b16 %v375
    %v1623 = vunpack.c.h.b16 %v375
    %v1624 = vunpack.c.l.b16 %v376
    %v1625 = vunpack.c.l.b16 %v377
    %v1626 = vunpack.c.h.b16 %v377
    %v1627 = vunpack.c.l.b16 %v378
    %v1628 = vunpack.c.l.b16 %v379
    %v1629 = vunpack.c.h.b16 %v379
    %v1630 = vunpack.c.l.b16 %v380
    %v1631 = vunpack.c.l.b16 %v381
    %v1632 = vunpack.c.h.b16 %v381
    %v1633 = vunpack.c.l.b16 %v382
    %v1634 = vunpack.c.l.b16 %v383
    %v1635 = vunpack.c.h.b16 %v383
    %v1636 = vunpack.c.l.b16 %v384
    %v1637 = vunpack.c.l.b16 %v385
    %v1638 = vunpack.c.h.b16 %v385
    %v1639 = vunpack.c.l.b16 %v386
    %v1640 = vunpack.c.l.b16 %v387
    %v1641 = vunpack.c.h.b16 %v387
    %v1642 = vunpack.c.l.b16 %v388
    %v1643 = vunpack.c.l.b16 %v389
    %v1644 = vunpack.c.h.b16 %v389
    %v1645 = vunpack.c.l.b16 %v390
    %v1646 = vunpack.c.l.b16 %v391
    %v1647 = vunpack.c.h.b16 %v391
    %v1648 = vunpack.c.l.b16 %v392
    %v1649 = vunpack.c.l.b16 %v393
    %v1650 = vunpack.c.h.b16 %v393
    %v1651 = vunpack.c.l.b16 %v394
    %v1652 = vunpack.c.l.b16 %v395
    %v1653 = vunpack.c.h.b16 %v395
    %v1654 = vunpack.c.l.b16 %v396
    %v1655 = vunpack.c.l.b16 %v397
    %v1656 = vunpack.c.h.b16 %v397
    %v1657 = vunpack.c.l.b16 %v398
    %v1658 = vunpack.c.l.b16 %v399
    %v1659 = vunpack.c.h.b16 %v399
    %v1660 = vunpack.c.l.b16 %v400
    %v1661 = vunpack.c.l.b16 %v401
    %v1662 = vunpack.c.h.b16 %v401
    %v1663 = vunpack.c.l.b16 %v402
    %v1664 = vunpack.c.l.b16 %v403
    %v1665 = vunpack.c.h.b16 %v403
    %v1666 = vunpack.c.l.b16 %v404
    %v1667 = vunpack.c.l.b16 %v405
    %v1668 = vunpack.c.h.b16 %v405
    %v1669 = vunpack.c.l.b16 %v406
    %v1670 = vunpack.c.l.b16 %v407
    %v1671 = vunpack.c.h.b16 %v407
    %v1672 = vunpack.c.l.b16 %v408
    %v1673 = vunpack.c.l.b16 %v409
    %v1674 = vunpack.c.h.b16 %v409
    %v1675 = vunpack.c.l.b16 %v410
    %v1676 = vunpack.c.l.b16 %v411
    %v1677 = vunpack.c.h.b16 %v411
    %v1678 = vunpack.c.l.b16 %v412
    %v1679 = vunpack.c.l.b16 %v413
    %v1680 = vunpack.c.h.b16 %v413
    %v1681 = vunpack.c.l.b16 %v414
    %v1682 = vunpack.c.l.b16 %v415
    %v1683 = vunpack.c.h.b16 %v415
    %v1684 = vunpack.c.l.b16 %v416
    %v1685 = vunpack.c.l.b16 %v417
    %v1686 = vunpack.c.h.b16 %v417
    %v1687 = vunpack.c.l.b16 %v418
    %v1688 = vunpack.c.l.b16 %v419
    %v1689 = vunpack.c.h.b16 %v419
    %v1690 = vunpack.c.l.b16 %v420
    %v1691 = vunpack.c.l.b16 %v421
    %v1692 = vunpack.c.h.b16 %v421
    %v1693 = vunpack.c.l.b16 %v422
    %v1694 = vunpack.c.l.b16 %v423
    %v1695 = vunpack.c.h.b16 %v423
    %v1696 = vunpack.c.l.b16 %v424
    %v1697 = vunpack.c.l.b16 %v425
    %v1698 = vunpack.c.h.b16 %v425
    %v1699 = vunpack.c.l.b16 %v426
    %v1700 = vunpack.c.l.b16 %v427
    %v1701 = vunpack.c.h.b16 %v427
    %v1702 = vunpack.c.l.b16 %v428
    %v1703 = vunpack.c.l.b16 %v429
    %v1704 = vunpack.c.h.b16 %v429
    %v1705 = vunpack.c.l.b16 %v430
    %v1706 = vunpack.c.l.b16 %v431
    %v1707 = vunpack.c.h.b16 %v431
    %v1708 = vunpack.c.l.b16 %v432
    %v1709 = vunpack.c.l.b16 %v433
    %v1710 = vunpack.c.h.b16 %v433
    %v1711 = vunpack.c.l.b16 %v434
    %v1712 = vunpack.c.l.b16 %v435
    %v1713 = vunpack.c.h.b16 %v435
    %v1714 = vunpack.c.l.b16 %v436
    %v1715 = vunpack.c.l.b16 %v437
    %v1716 = vunpack.c.h.b16 %v437
    %v1717 = vunpack.c.l.b16 %v438
    %v1718 = vunpack.c.l.b16 %v439
    %v1719 = vunpack.c.h.b16 %v439
    %v1720 = vunpack.c.l.b16 %v440
    %v1721 = vunpack.c.l.b16 %v441
    %v1722 = vunpack.c.h.b16 %v441
    %v1723 = vunpack.c.l.b16 %v442
    %v1724 = vunpack.c.l.b16 %v443
    %v1725 = vunpack.c.h.b16 %v443
    %v1726 = vunpack.c.l.b16 %v444
    %v1727 = vunpack.c.l.b16 %v445
    %v1728 = vunpack.c.h.b16 %v445
    %v1729 = vunpack.c.l.b16 %v446
    %v1730 = vunpack.c.l.b16 %v447
    %v1731 = vunpack.c.h.b16 %v447
    %v1732 = vunpack.c.l.b16 %v448
    %v1733 = vunpack.c.l.b16 %v449
    %v1734 = vunpack.c.h.b16 %v449
    %v1735 = vunpack.c.l.b16 %v450
    %v1736 = vunpack.c.l.b16 %v451
    %v1737 = vunpack.c.h.b16 %v451
    %v1738 = vunpack.c.l.b16 %v452
    %v1739 = vunpack.c.l.b16 %v453
    %v1740 = vunpack.c.h.b16 %v453
    %v1741 = vunpack.c.l.b16 %v454
    %v1742 = vunpack.c.l.b16 %v455
    %v1743 = vunpack.c.h.b16 %v455
    %v1744 = vunpack.c.l.b16 %v456
    %v1745 = vunpack.c.l.b16 %v457
    %v1746 = vunpack.c.h.b16 %v457
    %v1747 = vunpack.c.l.b16 %v458
    %v1748 = vunpack.c.l.b16 %v459
    %v1749 = vunpack.c.h.b16 %v459
    %v1750 = vunpack.c.l.b16 %v460
    %v1751 = vunpack.c.l.b16 %v461
    %v1752 = vunpack.c.h.b16 %v461
    %v1753 = vunpack.c.l.b16 %v462
    %v1754 = vunpack.c.l.b16 %v463
    %v1755 = vunpack.c.h.b16 %v463
    %v1756 = vunpack.c.l.b16 %v464
    %v1757 = vunpack.c.l.b16 %v465
    %v1758 = vunpack.c.h.b16 %v465
    %v1759 = vunpack.c.l.b16 %v466
    %v1760 = vunpack.c.l.b16 %v467
    %v1761 = vunpack.c.h.b16 %v467
    %v1762 = vunpack.c.l.b16 %v468
    %v1763 = vunpack.c.l.b16 %v469
    %v1764 = vunpack.c.h.b16 %v469
    %v1765 = vunpack.c.l.b16 %v470
    %v1766 = vunpack.c.l.b16 %v471
    %v1767 = vunpack.c.h.b16 %v471
    %v1768 = vunpack.c.l.b16 %v472
    %v1769 = vunpack.c.l.b16 %v473
    %v1770 = vunpack.c.h.b16 %v473
    %v1771 = vunpack.c.l.b16 %v474
    %v1772 = vunpack.c.l.b16 %v475
    %v1773 = vunpack.c.h.b16 %v475
    %v1774 = vunpack.c.l.b16 %v476
    %v1775 = vunpack.c.l.b16 %v477
    %v1776 = vunpack.c.h.b16 %v477
    %v1777 = vunpack.c.l.b16 %v478
    %v1778 = vunpack.c.l.b16 %v479
    %v1779 = vunpack.c.h.b16 %v479
    %v1780 = vunpack.c.l.b16 %v480
    %v1781 = vunpack.c.l.b16 %v481
    %v1782 = vunpack.c.h.b16 %v481
    %v1783 = vunpack.c.l.b16 %v482
    %v1784 = vunpack.c.l.b16 %v483
    %v1785 = vunpack.c.h.b16 %v483
    %v1786 = vunpack.c.l.b16 %v484
    %v1787 = vunpack.c.l.b16 %v485
    %v1788 = vunpack.c.h.b16 %v485
    %v1789 = vunpack.c.l.b16 %v486
    %v1790 = vunpack.c.l.b16 %v487
    %v1791 = vunpack.c.h.b16 %v487
    %v1792 = vunpack.c.l.b16 %v488
    %v1793 = vunpack.c.l.b16 %v489
    %v1794 = vunpack.c.h.b16 %v489
    %v1795 = vunpack.c.l.b16 %v490
    %v1796 = vunpack.c.l.b16 %v491
    %v1797 = vunpack.c.h.b16 %v491
    %v1798 = vunpack.c.l.b16 %v492
    %v1799 = vunpack.c.l.b16 %v493
    %v1800 = vunpack.c.h.b16 %v493
    %v1801 = vunpack.c.l.b16 %v494
    %v1802 = vunpack.c.l.b16 %v495
    %v1803 = vunpack.c.h.b16 %v495
    %v1804 = vunpack.c.l.b16 %v496
    %v1805 = vunpack.c.l.b16 %v497
    %v1806 = vunpack.c.h.b16 %v497
    %v1807 = vunpack.c.l.b16 %v498
    %v1808 = vunpack.c.l.b16 %v499
    %v1809 = vunpack.c.h.b16 %v499
    %v1810 = vunpack.c.l.b16 %v500
    %v1811 = vunpack.c.l.b16 %v501
    %v1812 = vunpack.c.h.b16 %v501
    %v1813 = vunpack.c.l.b16 %v502
    %v1814 = vunpack.c.l.b16 %v503
    %v1815 = vunpack.c.h.b16 %v503
    %v1816 = vunpack.c.l.b16 %v504
    %v1817 = vunpack.c.l.b16 %v505
    %v1818 = vunpack.c.h.b16 %v505
    %v1819 = vunpack.c.l.b16 %v506
    %v1820 = vunpack.c.l.b16 %v507
    %v1821 = vunpack.c.h.b16 %v507
    %v1822 = vunpack.c.l.b16 %v508
    %v1823 = vunpack.c.l.b16 %v509
    %v1824 = vunpack.c.h.b16 %v509
    %v1825 = vunpack.c.l.b16 %v510
    %v1826 = vunpack.c.l.b16 %v511
    %v1827 = vunpack.c.h.b16 %v511
    %v1828 = vunpack.c.l.b16 %v512
    %v1829 = vunpack.c.l.b16 %v513
    %v1830 = vunpack.c.h.b16 %v513
    %v1831 = vunpack.c.l.b16 %v514
    %v1832 = vunpack.c.l.b16 %v515
    %v1833 = vunpack.c.h.b16 %v515
    %v1834 = vunpack.c.l.b16 %v516
    %v1835 = vunpack.c.l.b16 %v517
    %v1836 = vunpack.c.h.b16 %v517
    %v1837 = vunpack.c.l.b16 %v518
    %v1838 = vunpack.c.l.b16 %v519
    %v1839 = vunpack.c.h.b16 %v519
    %v1840 = vunpack.c.l.b16 %v520
    %v1841 = vunpack.c.l.b16 %v521
    %v1842 = vunpack.c.h.b16 %v521
    %v1843 = vunpack.c.l.b16 %v522
    %v1844 = vunpack.c.l.b16 %v523
    %v1845 = vunpack.c.h.b16 %v523
    %v1846 = vunpack.c.l.b16 %v524
    %v1847 = vunpack.c.l.b16 %v525
    %v1848 = vunpack.c.h.b16 %v525
    %v1849 = vunpack.c.l.b16 %v526
    %v1850 = vunpack.c.l.b16 %v527
    %v1851 = vunpack.c.h.b16 %v527
    %v1852 = vunpack.c.l.b16 %v528
    %v1853 = vunpack.c.l.b16 %v529
    %v1854 = vunpack.c.h.b16 %v529
    %v1855 = vunpack.c.l.b16 %v530
    %v1856 = vunpack.c.l.b16 %v531
    %v1857 = vunpack.c.h.b16 %v531
    %v1858 = vunpack.c.l.b16 %v532
    %v1859 = vunpack.c.l.b16 %v533
    %v1860 = vunpack.c.h.b16 %v533
    %v1861 = vunpack.c.l.b16 %v534
    %v1862 = vunpack.c.l.b16 %v535
    %v1863 = vunpack.c.h.b16 %v535
    %v1864 = vunpack.c.l.b16 %v536
    %v1865 = vunpack.c.l.b16 %v537
    %v1866 = vunpack.c.h.b16 %v537
    %v1867 = vunpack.c.l.b16 %v538
    %v1868 = vunpack.c.l.b16 %v539
    %v1869 = vunpack.c.h.b16 %v539
    %v1870 = vunpack.c.l.b16 %v540
    %v1871 = vunpack.c.l.b16 %v541
    %v1872 = vunpack.c.h.b16 %v541
    %v1873 = vunpack.c.l.b16 %v542
    %v1874 = vunpack.c.l.b16 %v543
    %v1875 = vunpack.c.h.b16 %v543
    %v1876 = vunpack.c.l.b16 %v544
    %v1877 = vunpack.c.l.b16 %v545
    %v1878 = vunpack.c.h.b16 %v545
    %v1879 = vunpack.c.l.b16 %v546
    %v1880 = vunpack.c.l.b16 %v547
    %v1881 = vunpack.c.h.b16 %v547
    %v1882 = vunpack.c.l.b16 %v548
    %v1883 = vunpack.c.l.b16 %v549
    %v1884 = vunpack.c.h.b16 %v549
    %v1885 = vunpack.c.l.b16 %v550
    %v1886 = vunpack.c.l.b16 %v551
    %v1887 = vunpack.c.h.b16 %v551
    %v1888 = vunpack.c.l.b16 %v552
    %v1889 = vunpack.c.l.b16 %v553
    %v1890 = vunpack.c.h.b16 %v553
    %v1891 = vunpack.c.l.b16 %v554
    %v1892 = vunpack.c.l.b16 %v555
    %v1893 = vunpack.c.h.b16 %v555
    %v1894 = vunpack.c.l.b16 %v556
    %v1895 = vpack.c.b16 %v1130, %v1127
    %v1896 = vpack.c.b16 %v1131, %v1128
    %v1897 = vpack.c.b16 %v1132, %v1129
    %v1898 = vpack.c.b16 %v1136, %v1133
    %v1899 = vpack.c.b16 %v1137, %v1134
    %v1900 = vpack.c.b16 %v1138, %v1135
    %v1901 = vpack.c.b16 %v1142, %v1139
    %v1902 = vpack.c.b16 %v1143, %v1140
    %v1903 = vpack.c.b16 %v1144, %v1141
    %v1904 = vpack.c.b16 %v1148, %v1145
    %v1905 = vpack.c.b16 %v1149, %v1146
    %v1906 = vpack.c.b16 %v1150, %v1147
    %v1907 = vpack.c.b16 %v1154, %v1151
    %v1908 = vpack.c.b16 %v1155, %v1152
    %v1909 = vpack.c.b16 %v1156, %v1153
    %v1910 = vpack.c.b16 %v1160, %v1157
    %v1911 = vpack.c.b16 %v1161, %v1158
    %v1912 = vpack.c.b16 %v1162, %v1159
    %v1913 = vpack.c.b16 %v1166, %v1163
    %v1914 = vpack.c.b16 %v1167, %v1164
    %v1915 = vpack.c.b16 %v1168, %v1165
    %v1916 = vpack.c.b16 %v1172, %v1169
    %v1917 = vpack.c.b16 %v1173, %v1170
    %v1918 = vpack.c.b16 %v1174, %v1171
    %v1919 = vpack.c.b16 %v1178, %v1175
    %v1920 = vpack.c.b16 %v1179, %v1176
    %v1921 = vpack.c.b16 %v1180, %v1177
    %v1922 = vpack.c.b16 %v1184, %v1181
    %v1923 = vpack.c.b16 %v1185, %v1182
    %v1924 = vpack.c.b16 %v1186, %v1183
    %v1925 = vpack.c.b16 %v1190, %v1187
    %v1926 = vpack.c.b16 %v1191, %v1188
    %v1927 = vpack.c.b16 %v1192, %v1189
    %v1928 = vpack.c.b16 %v1196, %v1193
    %v1929 = vpack.c.b16 %v1197, %v1194
    %v1930 = vpack.c.b16 %v1198, %v1195
    %v1931 = vpack.c.b16 %v1202, %v1199
    %v1932 = vpack.c.b16 %v1203, %v1200
    %v1933 = vpack.c.b16 %v1204, %v1201
    %v1934 = vpack.c.b16 %v1208, %v1205
    %v1935 = vpack.c.b16 %v1209, %v1206
    %v1936 = vpack.c.b16 %v1210, %v1207
    %v1937 = vpack.c.b16 %v1214, %v1211
    %v1938 = vpack.c.b16 %v1215, %v1212
    %v1939 = vpack.c.b16 %v1216, %v1213
    %v1940 = vpack.c.b16 %v1220, %v1217
    %v1941 = vpack.c.b16 %v1221, %v1218
    %v1942 = vpack.c.b16 %v1222, %v1219
    %v1943 = vpack.c.b16 %v1226, %v1223
    %v1944 = vpack.c.b16 %v1227, %v1224
    %v1945 = vpack.c.b16 %v1228, %v1225
    %v1946 = vpack.c.b16 %v1232, %v1229
    %v1947 = vpack.c.b16 %v1233, %v1230
    %v1948 = vpack.c.b16 %v1234, %v1231
    %v1949 = vpack.c.b16 %v1238, %v1235
    %v1950 = vpack.c.b16 %v1239, %v1236
    %v1951 = vpack.c.b16 %v1240, %v1237
    %v1952 = vpack.c.b16 %v1244, %v1241
    %v1953 = vpack.c.b16 %v1245, %v1242
    %v1954 = vpack.c.b16 %v1246, %v1243
    %v1955 = vpack.c.b16 %v1250, %v1247
    %v1956 = vpack.c.b16 %v1251, %v1248
    %v1957 = vpack.c.b16 %v1252, %v1249
    %v1958 = vpack.c.b16 %v1256, %v1253
    %v1959 = vpack.c.b16 %v1257, %v1254
    %v1960 = vpack.c.b16 %v1258, %v1255
    %v1961 = vpack.c.b16 %v1262, %v1259
    %v1962 = vpack.c.b16 %v1263, %v1260
    %v1963 = vpack.c.b16 %v1264, %v1261
    %v1964 = vpack.c.b16 %v1268, %v1265
    %v1965 = vpack.c.b16 %v1269, %v1266
    %v1966 = vpack.c.b16 %v1270, %v1267
    %v1967 = vpack.c.b16 %v1274, %v1271
    %v1968 = vpack.c.b16 %v1275, %v1272
    %v1969 = vpack.c.b16 %v1276, %v1273
    %v1970 = vpack.c.b16 %v1280, %v1277
    %v1971 = vpack.c.b16 %v1281, %v1278
    %v1972 = vpack.c.b16 %v1282, %v1279
    %v1973 = vpack.c.b16 %v1286, %v1283
    %v1974 = vpack.c.b16 %v1287, %v1284
    %v1975 = vpack.c.b16 %v1288, %v1285
    %v1976 = vpack.c.b16 %v1292, %v1289
    %v1977 = vpack.c.b16 %v1293, %v1290
    %v1978 = vpack.c.b16 %v1294, %v1291
    %v1979 = vpack.c.b16 %v1298, %v1295
    %v1980 = vpack.c.b16 %v1299, %v1296
    %v1981 = vpack.c.b16 %v1300, %v1297
    %v1982 = vpack.c.b16 %v1304, %v1301
    %v1983 = vpack.c.b16 %v1305, %v1302
    %v1984 = vpack.c.b16 %v1306, %v1303
    %v1985 = vpack.c.b16 %v1310, %v1307
    %v1986 = vpack.c.b16 %v1311, %v1308
    %v1987 = vpack.c.b16 %v1312, %v1309
    %v1988 = vpack.c.b16 %v1316, %v1313
    %v1989 = vpack.c.b16 %v1317, %v1314
    %v1990 = vpack.c.b16 %v1318, %v1315
    %v1991 = vpack.c.b16 %v1322, %v1319
    %v1992 = vpack.c.b16 %v1323, %v1320
    %v1993 = vpack.c.b16 %v1324, %v1321
    %v1994 = vpack.c.b16 %v1328, %v1325
    %v1995 = vpack.c.b16 %v1329, %v1326
    %v1996 = vpack.c.b16 %v1330, %v1327
    %v1997 = vpack.c.b16 %v1334, %v1331
    %v1998 = vpack.c.b16 %v1335, %v1332
    %v1999 = vpack.c.b16 %v1336, %v1333
    %v2000 = vpack.c.b16 %v1340, %v1337
    %v2001 = vpack.c.b16 %v1341, %v1338
    %v2002 = vpack.c.b16 %v1342, %v1339
    %v2003 = vpack.c.b16 %v1346, %v1343
    %v2004 = vpack.c.b16 %v1347, %v1344
    %v2005 = vpack.c.b16 %v1348, %v1345
    %v2006 = vpack.c.b16 %v1352, %v1349
    %v2007 = vpack.c.b16 %v1353, %v1350
    %v2008 = vpack.c.b16 %v1354, %v1351
    %v2009 = vpack.c.b16 %v1358, %v1355
    %v2010 = vpack.c.b16 %v1359, %v1356
    %v2011 = vpack.c.b16 %v1360, %v1357
    %v2012 = vpack.c.b16 %v1364, %v1361
    %v2013 = vpack.c.b16 %v1365, %v1362
    %v2014 = vpack.c.b16 %v1366, %v1363
    %v2015 = vpack.c.b16 %v1370, %v1367
    %v2016 = vpack.c.b16 %v1371, %v1368
    %v2017 = vpack.c.b16 %v1372, %v1369
    %v2018 = vpack.c.b16 %v1376, %v1373
    %v2019 = vpack.c.b16 %v1377, %v1374
    %v2020 = vpack.c.b16 %v1378, %v1375
    %v2021 = vpack.c.b16 %v1382, %v1379
    %v2022 = vpack.c.b16 %v1383, %v1380
    %v2023 = vpack.c.b16 %v1384, %v1381
    %v2024 = vpack.c.b16 %v1388, %v1385
    %v2025 = vpack.c.b16 %v1389, %v1386
    %v2026 = vpack.c.b16 %v1390, %v1387
    %v2027 = vpack.c.b16 %v1394, %v1391
    %v2028 = vpack.c.b16 %v1395, %v1392
    %v2029 = vpack.c.b16 %v1396, %v1393
    %v2030 = vpack.c.b16 %v1400, %v1397
    %v2031 = vpack.c.b16 %v1401, %v1398
    %v2032 = vpack.c.b16 %v1402, %v1399
    %v2033 = vpack.c.b16 %v1406, %v1403
    %v2034 = vpack.c.b16 %v1407, %v1404
    %v2035 = vpack.c.b16 %v1408, %v1405
    %v2036 = vpack.c.b16 %v1412, %v1409
    %v2037 = vpack.c.b16 %v1413, %v1410
    %v2038 = vpack.c.b16 %v1414, %v1411
    %v2039 = vpack.c.b16 %v1418, %v1415
    %v2040 = vpack.c.b16 %v1419, %v1416
    %v2041 = vpack.c.b16 %v1420, %v1417
    %v2042 = vpack.c.b16 %v1424, %v1421
    %v2043 = vpack.c.b16 %v1425, %v1422
    %v2044 = vpack.c.b16 %v1426, %v1423
    %v2045 = vpack.c.b16 %v1430, %v1427
    %v2046 = vpack.c.b16 %v1431, %v1428
    %v2047 = vpack.c.b16 %v1432, %v1429
    %v2048 = vpack.c.b16 %v1436, %v1433
    %v2049 = vpack.c.b16 %v1437, %v1434
    %v2050 = vpack.c.b16 %v1438, %v1435
    %v2051 = vpack.c.b16 %v1442, %v1439
    %v2052 = vpack.c.b16 %v1443, %v1440
    %v2053 = vpack.c.b16 %v1444, %v1441
    %v2054 = vpack.c.b16 %v1448, %v1445
    %v2055 = vpack.c.b16 %v1449, %v1446
    %v2056 = vpack.c.b16 %v1450, %v1447
    %v2057 = vpack.c.b16 %v1454, %v1451
    %v2058 = vpack.c.b16 %v1455, %v1452
    %v2059 = vpack.c.b16 %v1456, %v1453
    %v2060 = vpack.c.b16 %v1460, %v1457
    %v2061 = vpack.c.b16 %v1461, %v1458
    %v2062 = vpack.c.b16 %v1462, %v1459
    %v2063 = vpack.c.b16 %v1466, %v1463
    %v2064 = vpack.c.b16 %v1467, %v1464
    %v2065 = vpack.c.b16 %v1468, %v1465
    %v2066 = vpack.c.b16 %v1472, %v1469
    %v2067 = vpack.c.b16 %v1473, %v1470
    %v2068 = vpack.c.b16 %v1474, %v1471
    %v2069 = vpack.c.b16 %v1478, %v1475
    %v2070 = vpack.c.b16 %v1479, %v1476
    %v2071 = vpack.c.b16 %v1480, %v1477
    %v2072 = vpack.c.b16 %v1484, %v1481
    %v2073 = vpack.c.b16 %v1485, %v1482
    %v2074 = vpack.c.b16 %v1486, %v1483
    %v2075 = vpack.c.b16 %v1490, %v1487
    %v2076 = vpack.c.b16 %v1491, %v1488
    %v2077 = vpack.c.b16 %v1492, %v1489
    %v2078 = vpack.c.b16 %v1496, %v1493
    %v2079 = vpack.c.b16 %v1497, %v1494
    %v2080 = vpack.c.b16 %v1498, %v1495
    %v2081 = vpack.c.b16 %v1502, %v1499
    %v2082 = vpack.c.b16 %v1503, %v1500
    %v2083 = vpack.c.b16 %v1504, %v1501
    %v2084 = vpack.c.b16 %v1508, %v1505
    %v2085 = vpack.c.b16 %v1509, %v1506
    %v2086 = vpack.c.b16 %v1510, %v1507
    %v2087 = vpack.c.b16 %v1514, %v1511
    %v2088 = vpack.c.b16 %v1515, %v1512
    %v2089 = vpack.c.b16 %v1516, %v1513
    %v2090 = vpack.c.b16 %v1520, %v1517
    %v2091 = vpack.c.b16 %v1521, %v1518
    %v2092 = vpack.c.b16 %v1522, %v1519
    %v2093 = vpack.c.b16 %v1526, %v1523
    %v2094 = vpack.c.b16 %v1527, %v1524
    %v2095 = vpack.c.b16 %v1528, %v1525
    %v2096 = vpack.c.b16 %v1532, %v1529
    %v2097 = vpack.c.b16 %v1533, %v1530
    %v2098 = vpack.c.b16 %v1534, %v1531
    %v2099 = vpack.c.b16 %v1538, %v1535
    %v2100 = vpack.c.b16 %v1539, %v1536
    %v2101 = vpack.c.b16 %v1540, %v1537
    %v2102 = vpack.c.b16 %v1544, %v1541
    %v2103 = vpack.c.b16 %v1545, %v1542
    %v2104 = vpack.c.b16 %v1546, %v1543
    %v2105 = vpack.c.b16 %v1550, %v1547
    %v2106 = vpack.c.b16 %v1551, %v1548
    %v2107 = vpack.c.b16 %v1552, %v1549
    %v2108 = vpack.c.b16 %v1556, %v1553
    %v2109 = vpack.c.b16 %v1557, %v1554
    %v2110 = vpack.c.b16 %v1558, %v1555
    %v2111 = vpack.c.b16 %v1562, %v1559
    %v2112 = vpack.c.b16 %v1563, %v1560
    %v2113 = vpack.c.b16 %v1564, %v1561
    %v2114 = vpack.c.b16 %v1568, %v1565
    %v2115 = vpack.c.b16 %v1569, %v1566
    %v2116 = vpack.c.b16 %v1570, %v1567
    %v2117 = vpack.c.b16 %v1574, %v1571
    %v2118 = vpack.c.b16 %v1575, %v1572
    %v2119 = vpack.c.b16 %v1576, %v1573
    %v2120 = vpack.c.b16 %v1580, %v1577
    %v2121 = vpack.c.b16 %v1581, %v1578
    %v2122 = vpack.c.b16 %v1582, %v1579
    %v2123 = vpack.c.b16 %v1586, %v1583
    %v2124 = vpack.c.b16 %v1587, %v1584
    %v2125 = vpack.c.b16 %v1588, %v1585
    %v2126 = vpack.c.b16 %v1592, %v1589
    %v2127 = vpack.c.b16 %v1593, %v1590
    %v2128 = vpack.c.b16 %v1594, %v1591
    %v2129 = vpack.c.b16 %v1598, %v1595
    %v2130 = vpack.c.b16 %v1599, %v1596
    %v2131 = vpack.c.b16 %v1600, %v1597
    %v2132 = vpack.c.b16 %v1604, %v1601
    %v2133 = vpack.c.b16 %v1605, %v1602
    %v2134 = vpack.c.b16 %v1606, %v1603
    %v2135 = vpack.c.b16 %v1610, %v1607
    %v2136 = vpack.c.b16 %v1611, %v1608
    %v2137 = vpack.c.b16 %v1612, %v1609
    %v2138 = vpack.c.b16 %v1616, %v1613
    %v2139 = vpack.c.b16 %v1617, %v1614
    %v2140 = vpack.c.b16 %v1618, %v1615
    %v2141 = vpack.c.b16 %v1622, %v1619
    %v2142 = vpack.c.b16 %v1623, %v1620
    %v2143 = vpack.c.b16 %v1624, %v1621
    %v2144 = vpack.c.b16 %v1628, %v1625
    %v2145 = vpack.c.b16 %v1629, %v1626
    %v2146 = vpack.c.b16 %v1630, %v1627
    %v2147 = vpack.c.b16 %v1634, %v1631
    %v2148 = vpack.c.b16 %v1635, %v1632
    %v2149 = vpack.c.b16 %v1636, %v1633
    %v2150 = vpack.c.b16 %v1640, %v1637
    %v2151 = vpack.c.b16 %v1641, %v1638
    %v2152 = vpack.c.b16 %v1642, %v1639
    %v2153 = vpack.c.b16 %v1646, %v1643
    %v2154 = vpack.c.b16 %v1647, %v1644
    %v2155 = vpack.c.b16 %v1648, %v1645
    %v2156 = vpack.c.b16 %v1652, %v1649
    %v2157 = vpack.c.b16 %v1653, %v1650
    %v2158 = vpack.c.b16 %v1654, %v1651
    %v2159 = vpack.c.b16 %v1658, %v1655
    %v2160 = vpack.c.b16 %v1659, %v1656
    %v2161 = vpack.c.b16 %v1660, %v1657
    %v2162 = vpack.c.b16 %v1664, %v1661
    %v2163 = vpack.c.b16 %v1665, %v1662
    %v2164 = vpack.c.b16 %v1666, %v1663
    %v2165 = vpack.c.b16 %v1670, %v1667
    %v2166 = vpack.c.b16 %v1671, %v1668
    %v2167 = vpack.c.b16 %v1672, %v1669
    %v2168 = vpack.c.b16 %v1676, %v1673
    %v2169 = vpack.c.b16 %v1677, %v1674
    %v2170 = vpack.c.b16 %v1678, %v1675
    %v2171 = vpack.c.b16 %v1682, %v1679
    %v2172 = vpack.c.b16 %v1683, %v1680
    %v2173 = vpack.c.b16 %v1684, %v1681
    %v2174 = vpack.c.b16 %v1688, %v1685
    %v2175 = vpack.c.b16 %v1689, %v1686
    %v2176 = vpack.c.b16 %v1690, %v1687
    %v2177 = vpack.c.b16 %v1694, %v1691
    %v2178 = vpack.c.b16 %v1695, %v1692
    %v2179 = vpack.c.b16 %v1696, %v1693
    %v2180 = vpack.c.b16 %v1700, %v1697
    %v2181 = vpack.c.b16 %v1701, %v1698
    %v2182 = vpack.c.b16 %v1702, %v1699
    %v2183 = vpack.c.b16 %v1706, %v1703
    %v2184 = vpack.c.b16 %v1707, %v1704
    %v2185 = vpack.c.b16 %v1708, %v1705
    %v2186 = vpack.c.b16 %v1712, %v1709
    %v2187 = vpack.c.b16 %v1713, %v1710
    %v2188 = vpack.c.b16 %v1714, %v1711
    %v2189 = vpack.c.b16 %v1718, %v1715
    %v2190 = vpack.c.b16 %v1719, %v1716
    %v2191 = vpack.c.b16 %v1720, %v1717
    %v2192 = vpack.c.b16 %v1724, %v1721
    %v2193 = vpack.c.b16 %v1725, %v1722
    %v2194 = vpack.c.b16 %v1726, %v1723
    %v2195 = vpack.c.b16 %v1730, %v1727
    %v2196 = vpack.c.b16 %v1731, %v1728
    %v2197 = vpack.c.b16 %v1732, %v1729
    %v2198 = vpack.c.b16 %v1736, %v1733
    %v2199 = vpack.c.b16 %v1737, %v1734
    %v2200 = vpack.c.b16 %v1738, %v1735
    %v2201 = vpack.c.b16 %v1742, %v1739
    %v2202 = vpack.c.b16 %v1743, %v1740
    %v2203 = vpack.c.b16 %v1744, %v1741
    %v2204 = vpack.c.b16 %v1748, %v1745
    %v2205 = vpack.c.b16 %v1749, %v1746
    %v2206 = vpack.c.b16 %v1750, %v1747
    %v2207 = vpack.c.b16 %v1754, %v1751
    %v2208 = vpack.c.b16 %v1755, %v1752
    %v2209 = vpack.c.b16 %v1756, %v1753
    %v2210 = vpack.c.b16 %v1760, %v1757
    %v2211 = vpack.c.b16 %v1761, %v1758
    %v2212 = vpack.c.b16 %v1762, %v1759
    %v2213 = vpack.c.b16 %v1766, %v1763
    %v2214 = vpack.c.b16 %v1767, %v1764
    %v2215 = vpack.c.b16 %v1768, %v1765
    %v2216 = vpack.c.b16 %v1772, %v1769
    %v2217 = vpack.c.b16 %v1773, %v1770
    %v2218 = vpack.c.b16 %v1774, %v1771
    %v2219 = vpack.c.b16 %v1778, %v1775
    %v2220 = vpack.c.b16 %v1779, %v1776
    %v2221 = vpack.c.b16 %v1780, %v1777
    %v2222 = vpack.c.b16 %v1784, %v1781
    %v2223 = vpack.c.b16 %v1785, %v1782
    %v2224 = vpack.c.b16 %v1786, %v1783
    %v2225 = vpack.c.b16 %v1790, %v1787
    %v2226 = vpack.c.b16 %v1791, %v1788
    %v2227 = vpack.c.b16 %v1792, %v1789
    %v2228 = vpack.c.b16 %v1796, %v1793
    %v2229 = vpack.c.b16 %v1797, %v1794
    %v2230 = vpack.c.b16 %v1798, %v1795
    %v2231 = vpack.c.b16 %v1802, %v1799
    %v2232 = vpack.c.b16 %v1803, %v1800
    %v2233 = vpack.c.b16 %v1804, %v1801
    %v2234 = vpack.c.b16 %v1808, %v1805
    %v2235 = vpack.c.b16 %v1809, %v1806
    %v2236 = vpack.c.b16 %v1810, %v1807
    %v2237 = vpack.c.b16 %v1814, %v1811
    %v2238 = vpack.c.b16 %v1815, %v1812
    %v2239 = vpack.c.b16 %v1816, %v1813
    %v2240 = vpack.c.b16 %v1820, %v1817
    %v2241 = vpack.c.b16 %v1821, %v1818
    %v2242 = vpack.c.b16 %v1822, %v1819
    %v2243 = vpack.c.b16 %v1826, %v1823
    %v2244 = vpack.c.b16 %v1827, %v1824
    %v2245 = vpack.c.b16 %v1828, %v1825
    %v2246 = vpack.c.b16 %v1832, %v1829
    %v2247 = vpack.c.b16 %v1833, %v1830
    %v2248 = vpack.c.b16 %v1834, %v1831
    %v2249 = vpack.c.b16 %v1838, %v1835
    %v2250 = vpack.c.b16 %v1839, %v1836
    %v2251 = vpack.c.b16 %v1840, %v1837
    %v2252 = vpack.c.b16 %v1844, %v1841
    %v2253 = vpack.c.b16 %v1845, %v1842
    %v2254 = vpack.c.b16 %v1846, %v1843
    %v2255 = vpack.c.b16 %v1850, %v1847
    %v2256 = vpack.c.b16 %v1851, %v1848
    %v2257 = vpack.c.b16 %v1852, %v1849
    %v2258 = vpack.c.b16 %v1856, %v1853
    %v2259 = vpack.c.b16 %v1857, %v1854
    %v2260 = vpack.c.b16 %v1858, %v1855
    %v2261 = vpack.c.b16 %v1862, %v1859
    %v2262 = vpack.c.b16 %v1863, %v1860
    %v2263 = vpack.c.b16 %v1864, %v1861
    %v2264 = vpack.c.b16 %v1868, %v1865
    %v2265 = vpack.c.b16 %v1869, %v1866
    %v2266 = vpack.c.b16 %v1870, %v1867
    %v2267 = vpack.c.b16 %v1874, %v1871
    %v2268 = vpack.c.b16 %v1875, %v1872
    %v2269 = vpack.c.b16 %v1876, %v1873
    %v2270 = vpack.c.b16 %v1880, %v1877
    %v2271 = vpack.c.b16 %v1881, %v1878
    %v2272 = vpack.c.b16 %v1882, %v1879
    %v2273 = vpack.c.b16 %v1886, %v1883
    %v2274 = vpack.c.b16 %v1887, %v1884
    %v2275 = vpack.c.b16 %v1888, %v1885
    %v2276 = vpack.c.b16 %v1892, %v1889
    %v2277 = vpack.c.b16 %v1893, %v1890
    %v2278 = vpack.c.b16 %v1894, %v1891
    %2663 = vmatprep.subr.bf16.mxu0 %v1917
    %2664 = vmatpush1.bf16.msra.mxu0 %v1916
    %2665 = vmatprep.subr.bf16.mxu0 %v1914
    %2666 = vmatpush1.bf16.msra.mxu0 %v1913
    %2667 = vmatprep.subr.bf16.mxu0 %v1911
    %2668 = vmatpush1.bf16.msra.mxu0 %v1910
    %2669 = vmatprep.subr.bf16.mxu0 %v1908
    %2670 = vmatpush1.bf16.msra.mxu0 %v1907
    %2671 = vmatprep.subr.bf16.mxu0 %v1905
    %2672 = vmatpush1.bf16.msra.mxu0 %v1904
    %2673 = vmatprep.subr.bf16.mxu0 %v1902
    %2674 = vmatpush1.bf16.msra.mxu0 %v1901
    %2675 = vmatprep.subr.bf16.mxu0 %v1899
    %2676 = vmatpush1.bf16.msra.mxu0 %v1898
    %2677 = vmatprep.subr.bf16.mxu0 %v1896
    %2678 = vmatpush1.bf16.msra.mxu0 %v1895
    %2679 = vmatprep.subr.bf16.mxu0 %v1941
    %2680 = vmatpush2.bf16.msra.mxu0 %v1940
    %2681 = vmatprep.subr.bf16.mxu0 %v1938
    %2682 = vmatpush2.bf16.msra.mxu0 %v1937
    %2683 = vmatprep.subr.bf16.mxu0 %v1935
    %2684 = vmatpush2.bf16.msra.mxu0 %v1934
    %2685 = vmatprep.subr.bf16.mxu0 %v1932
    %2686 = vmatpush2.bf16.msra.mxu0 %v1931
    %2687 = vmatprep.subr.bf16.mxu0 %v1929
    %2688 = vmatpush2.bf16.msra.mxu0 %v1928
    %2689 = vmatprep.subr.bf16.mxu0 %v1926
    %2690 = vmatpush2.bf16.msra.mxu0 %v1925
    %2691 = vmatprep.subr.bf16.mxu0 %v1923
    %2692 = vmatpush2.bf16.msra.mxu0 %v1922
    %2693 = vmatprep.subr.bf16.mxu0 %v1920
    %2694 = vmatpush2.bf16.msra.mxu0 %v1919
    %2695 = vmatprep.mubr.bf16.mxu0 %v584
    %2696 = vmatmul.mubr.bf16.gmra.mxu0 %v583
    %v2697 = vpop.f32.mrf.mxu0
    %v2698 = vadd.f32 %v558, %v2697
    %v2699 = vpop.f32.mrf.mxu0
    %v2700 = vadd.f32 %v558, %v2699
    %v2701 = vpop.f32.mrf.mxu0
    %v2702 = vpop.f32.mrf.mxu0
    %2703 = vdwg.mxu0
    %2704 = vmatprep.subr.bf16.mxu0 %v1965
    %2705 = vmatpush1.bf16.msra.mxu0 %v1964
    %2706 = vmatprep.subr.bf16.mxu0 %v1962
    %2707 = vmatpush1.bf16.msra.mxu0 %v1961
    %2708 = vmatprep.subr.bf16.mxu0 %v1959
    %2709 = vmatpush1.bf16.msra.mxu0 %v1958
    %2710 = vmatprep.subr.bf16.mxu0 %v1956
    %2711 = vmatpush1.bf16.msra.mxu0 %v1955
    %2712 = vmatprep.subr.bf16.mxu0 %v1953
    %2713 = vmatpush1.bf16.msra.mxu0 %v1952
    %2714 = vmatprep.subr.bf16.mxu0 %v1950
    %2715 = vmatpush1.bf16.msra.mxu0 %v1949
    %2716 = vmatprep.subr.bf16.mxu0 %v1947
    %2717 = vmatpush1.bf16.msra.mxu0 %v1946
    %2718 = vmatprep.subr.bf16.mxu0 %v1944
    %2719 = vmatpush1.bf16.msra.mxu0 %v1943
    %2720 = vmatprep.subr.bf16.mxu0 %v1989
    %2721 = vmatpush2.bf16.msra.mxu0 %v1988
    %2722 = vmatprep.subr.bf16.mxu0 %v1986
    %2723 = vmatpush2.bf16.msra.mxu0 %v1985
    %2724 = vmatprep.subr.bf16.mxu0 %v1983
    %2725 = vmatpush2.bf16.msra.mxu0 %v1982
    %2726 = vmatprep.subr.bf16.mxu0 %v1980
    %2727 = vmatpush2.bf16.msra.mxu0 %v1979
    %2728 = vmatprep.subr.bf16.mxu0 %v1977
    %2729 = vmatpush2.bf16.msra.mxu0 %v1976
    %2730 = vmatprep.subr.bf16.mxu0 %v1974
    %2731 = vmatpush2.bf16.msra.mxu0 %v1973
    %2732 = vmatprep.subr.bf16.mxu0 %v1971
    %2733 = vmatpush2.bf16.msra.mxu0 %v1970
    %2734 = vmatprep.subr.bf16.mxu0 %v1968
    %2735 = vmatpush2.bf16.msra.mxu0 %v1967
    %2736 = vmatprep.mubr.bf16.mxu0 %v586
    %2737 = vmatmul.mubr.bf16.gmra.mxu0 %v585
    %v2738 = vpop.f32.mrf.mxu0
    %v2739 = vadd.f32 %v2698, %v2738
    %v2740 = vpop.f32.mrf.mxu0
    %v2741 = vadd.f32 %v2700, %v2740
    %v2742 = vpop.f32.mrf.mxu0
    %v2743 = vpop.f32.mrf.mxu0
    %2744 = vdwg.mxu0
    %2745 = vmatprep.subr.bf16.mxu0 %v2013
    %2746 = vmatpush1.bf16.msra.mxu0 %v2012
    %2747 = vmatprep.subr.bf16.mxu0 %v2010
    %2748 = vmatpush1.bf16.msra.mxu0 %v2009
    %2749 = vmatprep.subr.bf16.mxu0 %v2007
    %2750 = vmatpush1.bf16.msra.mxu0 %v2006
    %2751 = vmatprep.subr.bf16.mxu0 %v2004
    %2752 = vmatpush1.bf16.msra.mxu0 %v2003
    %2753 = vmatprep.subr.bf16.mxu0 %v2001
    %2754 = vmatpush1.bf16.msra.mxu0 %v2000
    %2755 = vmatprep.subr.bf16.mxu0 %v1998
    %2756 = vmatpush1.bf16.msra.mxu0 %v1997
    %2757 = vmatprep.subr.bf16.mxu0 %v1995
    %2758 = vmatpush1.bf16.msra.mxu0 %v1994
    %2759 = vmatprep.subr.bf16.mxu0 %v1992
    %2760 = vmatpush1.bf16.msra.mxu0 %v1991
    %2761 = vmatprep.subr.bf16.mxu0 %v2037
    %2762 = vmatpush2.bf16.msra.mxu0 %v2036
    %2763 = vmatprep.subr.bf16.mxu0 %v2034
    %2764 = vmatpush2.bf16.msra.mxu0 %v2033
    %2765 = vmatprep.subr.bf16.mxu0 %v2031
    %2766 = vmatpush2.bf16.msra.mxu0 %v2030
    %2767 = vmatprep.subr.bf16.mxu0 %v2028
    %2768 = vmatpush2.bf16.msra.mxu0 %v2027
    %2769 = vmatprep.subr.bf16.mxu0 %v2025
    %2770 = vmatpush2.bf16.msra.mxu0 %v2024
    %2771 = vmatprep.subr.bf16.mxu0 %v2022
    %2772 = vmatpush2.bf16.msra.mxu0 %v2021
    %2773 = vmatprep.subr.bf16.mxu0 %v2019
    %2774 = vmatpush2.bf16.msra.mxu0 %v2018
    %2775 = vmatprep.subr.bf16.mxu0 %v2016
    %2776 = vmatpush2.bf16.msra.mxu0 %v2015
    %2777 = vmatprep.mubr.bf16.mxu0 %v588
    %2778 = vmatmul.mubr.bf16.gmra.mxu0 %v587
    %v2779 = vpop.f32.mrf.mxu0
    %v2780 = vadd.f32 %v2739, %v2779
    %v2781 = vpop.f32.mrf.mxu0
    %v2782 = vadd.f32 %v2741, %v2781
    %v2783 = vpop.f32.mrf.mxu0
    %v2784 = vpop.f32.mrf.mxu0
    %2785 = vdwg.mxu0
    %2786 = vmatprep.subr.bf16.mxu0 %v2061
    %2787 = vmatpush1.bf16.msra.mxu0 %v2060
    %2788 = vmatprep.subr.bf16.mxu0 %v2058
    %2789 = vmatpush1.bf16.msra.mxu0 %v2057
    %2790 = vmatprep.subr.bf16.mxu0 %v2055
    %2791 = vmatpush1.bf16.msra.mxu0 %v2054
    %2792 = vmatprep.subr.bf16.mxu0 %v2052
    %2793 = vmatpush1.bf16.msra.mxu0 %v2051
    %2794 = vmatprep.subr.bf16.mxu0 %v2049
    %2795 = vmatpush1.bf16.msra.mxu0 %v2048
    %2796 = vmatprep.subr.bf16.mxu0 %v2046
    %2797 = vmatpush1.bf16.msra.mxu0 %v2045
    %2798 = vmatprep.subr.bf16.mxu0 %v2043
    %2799 = vmatpush1.bf16.msra.mxu0 %v2042
    %2800 = vmatprep.subr.bf16.mxu0 %v2040
    %2801 = vmatpush1.bf16.msra.mxu0 %v2039
    %2802 = vmatprep.subr.bf16.mxu0 %v2085
    %2803 = vmatpush2.bf16.msra.mxu0 %v2084
    %2804 = vmatprep.subr.bf16.mxu0 %v2082
    %2805 = vmatpush2.bf16.msra.mxu0 %v2081
    %2806 = vmatprep.subr.bf16.mxu0 %v2079
    %2807 = vmatpush2.bf16.msra.mxu0 %v2078
    %2808 = vmatprep.subr.bf16.mxu0 %v2076
    %2809 = vmatpush2.bf16.msra.mxu0 %v2075
    %2810 = vmatprep.subr.bf16.mxu0 %v2073
    %2811 = vmatpush2.bf16.msra.mxu0 %v2072
    %2812 = vmatprep.subr.bf16.mxu0 %v2070
    %2813 = vmatpush2.bf16.msra.mxu0 %v2069
    %2814 = vmatprep.subr.bf16.mxu0 %v2067
    %2815 = vmatpush2.bf16.msra.mxu0 %v2066
    %2816 = vmatprep.subr.bf16.mxu0 %v2064
    %2817 = vmatpush2.bf16.msra.mxu0 %v2063
    %2818 = vmatprep.mubr.bf16.mxu0 %v590
    %2819 = vmatmul.mubr.bf16.gmra.mxu0 %v589
    %v2820 = vpop.f32.mrf.mxu0
    %v2821 = vadd.f32 %v2780, %v2820
    %v2822 = vpop.f32.mrf.mxu0
    %v2823 = vadd.f32 %v2782, %v2822
    %v2824 = vpop.f32.mrf.mxu0
    %v2825 = vpop.f32.mrf.mxu0
    %2826 = vdwg.mxu0
    %2827 = vmatprep.subr.bf16.mxu0 %v2109
    %2828 = vmatpush1.bf16.msra.mxu0 %v2108
    %2829 = vmatprep.subr.bf16.mxu0 %v2106
    %2830 = vmatpush1.bf16.msra.mxu0 %v2105
    %2831 = vmatprep.subr.bf16.mxu0 %v2103
    %2832 = vmatpush1.bf16.msra.mxu0 %v2102
    %2833 = vmatprep.subr.bf16.mxu0 %v2100
    %2834 = vmatpush1.bf16.msra.mxu0 %v2099
    %2835 = vmatprep.subr.bf16.mxu0 %v2097
    %2836 = vmatpush1.bf16.msra.mxu0 %v2096
    %2837 = vmatprep.subr.bf16.mxu0 %v2094
    %2838 = vmatpush1.bf16.msra.mxu0 %v2093
    %2839 = vmatprep.subr.bf16.mxu0 %v2091
    %2840 = vmatpush1.bf16.msra.mxu0 %v2090
    %2841 = vmatprep.subr.bf16.mxu0 %v2088
    %2842 = vmatpush1.bf16.msra.mxu0 %v2087
    %2843 = vmatprep.subr.bf16.mxu0 %v2133
    %2844 = vmatpush2.bf16.msra.mxu0 %v2132
    %2845 = vmatprep.subr.bf16.mxu0 %v2130
    %2846 = vmatpush2.bf16.msra.mxu0 %v2129
    %2847 = vmatprep.subr.bf16.mxu0 %v2127
    %2848 = vmatpush2.bf16.msra.mxu0 %v2126
    %2849 = vmatprep.subr.bf16.mxu0 %v2124
    %2850 = vmatpush2.bf16.msra.mxu0 %v2123
    %2851 = vmatprep.subr.bf16.mxu0 %v2121
    %2852 = vmatpush2.bf16.msra.mxu0 %v2120
    %2853 = vmatprep.subr.bf16.mxu0 %v2118
    %2854 = vmatpush2.bf16.msra.mxu0 %v2117
    %2855 = vmatprep.subr.bf16.mxu0 %v2115
    %2856 = vmatpush2.bf16.msra.mxu0 %v2114
    %2857 = vmatprep.subr.bf16.mxu0 %v2112
    %2858 = vmatpush2.bf16.msra.mxu0 %v2111
    %2859 = vmatprep.mubr.bf16.mxu0 %v592
    %2860 = vmatmul.mubr.bf16.gmra.mxu0 %v591
    %v2861 = vpop.f32.mrf.mxu0
    %v2862 = vadd.f32 %v2821, %v2861
    %v2863 = vpop.f32.mrf.mxu0
    %v2864 = vadd.f32 %v2823, %v2863
    %v2865 = vpop.f32.mrf.mxu0
    %v2866 = vpop.f32.mrf.mxu0
    %2867 = vdwg.mxu0
    %2868 = vmatprep.subr.bf16.mxu0 %v2157
    %2869 = vmatpush1.bf16.msra.mxu0 %v2156
    %2870 = vmatprep.subr.bf16.mxu0 %v2154
    %2871 = vmatpush1.bf16.msra.mxu0 %v2153
    %2872 = vmatprep.subr.bf16.mxu0 %v2151
    %2873 = vmatpush1.bf16.msra.mxu0 %v2150
    %2874 = vmatprep.subr.bf16.mxu0 %v2148
    %2875 = vmatpush1.bf16.msra.mxu0 %v2147
    %2876 = vmatprep.subr.bf16.mxu0 %v2145
    %2877 = vmatpush1.bf16.msra.mxu0 %v2144
    %2878 = vmatprep.subr.bf16.mxu0 %v2142
    %2879 = vmatpush1.bf16.msra.mxu0 %v2141
    %2880 = vmatprep.subr.bf16.mxu0 %v2139
    %2881 = vmatpush1.bf16.msra.mxu0 %v2138
    %2882 = vmatprep.subr.bf16.mxu0 %v2136
    %2883 = vmatpush1.bf16.msra.mxu0 %v2135
    %2884 = vmatprep.subr.bf16.mxu0 %v2181
    %2885 = vmatpush2.bf16.msra.mxu0 %v2180
    %2886 = vmatprep.subr.bf16.mxu0 %v2178
    %2887 = vmatpush2.bf16.msra.mxu0 %v2177
    %2888 = vmatprep.subr.bf16.mxu0 %v2175
    %2889 = vmatpush2.bf16.msra.mxu0 %v2174
    %2890 = vmatprep.subr.bf16.mxu0 %v2172
    %2891 = vmatpush2.bf16.msra.mxu0 %v2171
    %2892 = vmatprep.subr.bf16.mxu0 %v2169
    %2893 = vmatpush2.bf16.msra.mxu0 %v2168
    %2894 = vmatprep.subr.bf16.mxu0 %v2166
    %2895 = vmatpush2.bf16.msra.mxu0 %v2165
    %2896 = vmatprep.subr.bf16.mxu0 %v2163
    %2897 = vmatpush2.bf16.msra.mxu0 %v2162
    %2898 = vmatprep.subr.bf16.mxu0 %v2160
    %2899 = vmatpush2.bf16.msra.mxu0 %v2159
    %2900 = vmatprep.mubr.bf16.mxu0 %v594
    %2901 = vmatmul.mubr.bf16.gmra.mxu0 %v593
    %v2902 = vpop.f32.mrf.mxu0
    %v2903 = vadd.f32 %v2862, %v2902
    %v2904 = vpop.f32.mrf.mxu0
    %v2905 = vadd.f32 %v2864, %v2904
    %v2906 = vpop.f32.mrf.mxu0
    %v2907 = vpop.f32.mrf.mxu0
    %2908 = vdwg.mxu0
    %2909 = vmatprep.subr.bf16.mxu0 %v2205
    %2910 = vmatpush1.bf16.msra.mxu0 %v2204
    %2911 = vmatprep.subr.bf16.mxu0 %v2202
    %2912 = vmatpush1.bf16.msra.mxu0 %v2201
    %2913 = vmatprep.subr.bf16.mxu0 %v2199
    %2914 = vmatpush1.bf16.msra.mxu0 %v2198
    %2915 = vmatprep.subr.bf16.mxu0 %v2196
    %2916 = vmatpush1.bf16.msra.mxu0 %v2195
    %2917 = vmatprep.subr.bf16.mxu0 %v2193
    %2918 = vmatpush1.bf16.msra.mxu0 %v2192
    %2919 = vmatprep.subr.bf16.mxu0 %v2190
    %2920 = vmatpush1.bf16.msra.mxu0 %v2189
    %2921 = vmatprep.subr.bf16.mxu0 %v2187
    %2922 = vmatpush1.bf16.msra.mxu0 %v2186
    %2923 = vmatprep.subr.bf16.mxu0 %v2184
    %2924 = vmatpush1.bf16.msra.mxu0 %v2183
    %2925 = vmatprep.subr.bf16.mxu0 %v2229
    %2926 = vmatpush2.bf16.msra.mxu0 %v2228
    %2927 = vmatprep.subr.bf16.mxu0 %v2226
    %2928 = vmatpush2.bf16.msra.mxu0 %v2225
    %2929 = vmatprep.subr.bf16.mxu0 %v2223
    %2930 = vmatpush2.bf16.msra.mxu0 %v2222
    %2931 = vmatprep.subr.bf16.mxu0 %v2220
    %2932 = vmatpush2.bf16.msra.mxu0 %v2219
    %2933 = vmatprep.subr.bf16.mxu0 %v2217
    %2934 = vmatpush2.bf16.msra.mxu0 %v2216
    %2935 = vmatprep.subr.bf16.mxu0 %v2214
    %2936 = vmatpush2.bf16.msra.mxu0 %v2213
    %2937 = vmatprep.subr.bf16.mxu0 %v2211
    %2938 = vmatpush2.bf16.msra.mxu0 %v2210
    %2939 = vmatprep.subr.bf16.mxu0 %v2208
    %2940 = vmatpush2.bf16.msra.mxu0 %v2207
    %2941 = vmatprep.mubr.bf16.mxu0 %v596
    %2942 = vmatmul.mubr.bf16.gmra.mxu0 %v595
    %v2943 = vpop.f32.mrf.mxu0
    %v2944 = vadd.f32 %v2903, %v2943
    %v2945 = vpop.f32.mrf.mxu0
    %v2946 = vadd.f32 %v2905, %v2945
    %v2947 = vpop.f32.mrf.mxu0
    %v2948 = vpop.f32.mrf.mxu0
    %2949 = vdwg.mxu0
    %2950 = vmatprep.subr.bf16.mxu0 %v2253
    %2951 = vmatpush1.bf16.msra.mxu0 %v2252
    %2952 = vmatprep.subr.bf16.mxu0 %v2250
    %2953 = vmatpush1.bf16.msra.mxu0 %v2249
    %2954 = vmatprep.subr.bf16.mxu0 %v2247
    %2955 = vmatpush1.bf16.msra.mxu0 %v2246
    %2956 = vmatprep.subr.bf16.mxu0 %v2244
    %2957 = vmatpush1.bf16.msra.mxu0 %v2243
    %2958 = vmatprep.subr.bf16.mxu0 %v2241
    %2959 = vmatpush1.bf16.msra.mxu0 %v2240
    %2960 = vmatprep.subr.bf16.mxu0 %v2238
    %2961 = vmatpush1.bf16.msra.mxu0 %v2237
    %2962 = vmatprep.subr.bf16.mxu0 %v2235
    %2963 = vmatpush1.bf16.msra.mxu0 %v2234
    %2964 = vmatprep.subr.bf16.mxu0 %v2232
    %2965 = vmatpush1.bf16.msra.mxu0 %v2231
    %2966 = vmatprep.subr.bf16.mxu0 %v2277
    %2967 = vmatpush2.bf16.msra.mxu0 %v2276
    %2968 = vmatprep.subr.bf16.mxu0 %v2274
    %2969 = vmatpush2.bf16.msra.mxu0 %v2273
    %2970 = vmatprep.subr.bf16.mxu0 %v2271
    %2971 = vmatpush2.bf16.msra.mxu0 %v2270
    %2972 = vmatprep.subr.bf16.mxu0 %v2268
    %2973 = vmatpush2.bf16.msra.mxu0 %v2267
    %2974 = vmatprep.subr.bf16.mxu0 %v2265
    %2975 = vmatpush2.bf16.msra.mxu0 %v2264
    %2976 = vmatprep.subr.bf16.mxu0 %v2262
    %2977 = vmatpush2.bf16.msra.mxu0 %v2261
    %2978 = vmatprep.subr.bf16.mxu0 %v2259
    %2979 = vmatpush2.bf16.msra.mxu0 %v2258
    %2980 = vmatprep.subr.bf16.mxu0 %v2256
    %2981 = vmatpush2.bf16.msra.mxu0 %v2255
    %2982 = vmatprep.mubr.bf16.mxu0 %v598
    %2983 = vmatmul.mubr.bf16.gmra.mxu0 %v597
    %v2984 = vpop.f32.mrf.mxu0
    %v2985 = vadd.f32 %v2944, %v2984
    %v2986 = vpop.f32.mrf.mxu0
    %v2987 = vadd.f32 %v2946, %v2986
    %v2988 = vpop.f32.mrf.mxu0
    %v2989 = vpop.f32.mrf.mxu0
    %2990 = vdwg.mxu0
    %2991 = vmatprep.subr.bf16.mxu0 0
    %2992 = vmatpush1.bf16.msra.mxu0 %v1918
    %2993 = vmatprep.subr.bf16.mxu0 0
    %2994 = vmatpush1.bf16.msra.mxu0 %v1915
    %2995 = vmatprep.subr.bf16.mxu0 0
    %2996 = vmatpush1.bf16.msra.mxu0 %v1912
    %2997 = vmatprep.subr.bf16.mxu0 0
    %2998 = vmatpush1.bf16.msra.mxu0 %v1909
    %2999 = vmatprep.subr.bf16.mxu0 0
    %3000 = vmatpush1.bf16.msra.mxu0 %v1906
    %3001 = vmatprep.subr.bf16.mxu0 0
    %3002 = vmatpush1.bf16.msra.mxu0 %v1903
    %3003 = vmatprep.subr.bf16.mxu0 0
    %3004 = vmatpush1.bf16.msra.mxu0 %v1900
    %3005 = vmatprep.subr.bf16.mxu0 0
    %3006 = vmatpush1.bf16.msra.mxu0 %v1897
    %3007 = vmatprep.subr.bf16.mxu0 0
    %3008 = vmatpush2.bf16.msra.mxu0 %v1942
    %3009 = vmatprep.subr.bf16.mxu0 0
    %3010 = vmatpush2.bf16.msra.mxu0 %v1939
    %3011 = vmatprep.subr.bf16.mxu0 0
    %3012 = vmatpush2.bf16.msra.mxu0 %v1936
    %3013 = vmatprep.subr.bf16.mxu0 0
    %3014 = vmatpush2.bf16.msra.mxu0 %v1933
    %3015 = vmatprep.subr.bf16.mxu0 0
    %3016 = vmatpush2.bf16.msra.mxu0 %v1930
    %3017 = vmatprep.subr.bf16.mxu0 0
    %3018 = vmatpush2.bf16.msra.mxu0 %v1927
    %3019 = vmatprep.subr.bf16.mxu0 0
    %3020 = vmatpush2.bf16.msra.mxu0 %v1924
    %3021 = vmatprep.subr.bf16.mxu0 0
    %3022 = vmatpush2.bf16.msra.mxu0 %v1921
    %3023 = vmatprep.mubr.bf16.mxu0 %v584
    %3024 = vmatmul.mubr.bf16.gmra.mxu0 %v583
    %v3025 = vpop.f32.mrf.mxu0
    %v3026 = vadd.f32 %v558, %v3025
    %v3027 = vpop.f32.mrf.mxu0
    %v3028 = vpop.f32.mrf.mxu0
    %v3029 = vpop.f32.mrf.mxu0
    %3030 = vdwg.mxu0
    %3031 = vmatprep.subr.bf16.mxu0 0
    %3032 = vmatpush1.bf16.msra.mxu0 %v1966
    %3033 = vmatprep.subr.bf16.mxu0 0
    %3034 = vmatpush1.bf16.msra.mxu0 %v1963
    %3035 = vmatprep.subr.bf16.mxu0 0
    %3036 = vmatpush1.bf16.msra.mxu0 %v1960
    %3037 = vmatprep.subr.bf16.mxu0 0
    %3038 = vmatpush1.bf16.msra.mxu0 %v1957
    %3039 = vmatprep.subr.bf16.mxu0 0
    %3040 = vmatpush1.bf16.msra.mxu0 %v1954
    %3041 = vmatprep.subr.bf16.mxu0 0
    %3042 = vmatpush1.bf16.msra.mxu0 %v1951
    %3043 = vmatprep.subr.bf16.mxu0 0
    %3044 = vmatpush1.bf16.msra.mxu0 %v1948
    %3045 = vmatprep.subr.bf16.mxu0 0
    %3046 = vmatpush1.bf16.msra.mxu0 %v1945
    %3047 = vmatprep.subr.bf16.mxu0 0
    %3048 = vmatpush2.bf16.msra.mxu0 %v1990
    %3049 = vmatprep.subr.bf16.mxu0 0
    %3050 = vmatpush2.bf16.msra.mxu0 %v1987
    %3051 = vmatprep.subr.bf16.mxu0 0
    %3052 = vmatpush2.bf16.msra.mxu0 %v1984
    %3053 = vmatprep.subr.bf16.mxu0 0
    %3054 = vmatpush2.bf16.msra.mxu0 %v1981
    %3055 = vmatprep.subr.bf16.mxu0 0
    %3056 = vmatpush2.bf16.msra.mxu0 %v1978
    %3057 = vmatprep.subr.bf16.mxu0 0
    %3058 = vmatpush2.bf16.msra.mxu0 %v1975
    %3059 = vmatprep.subr.bf16.mxu0 0
    %3060 = vmatpush2.bf16.msra.mxu0 %v1972
    %3061 = vmatprep.subr.bf16.mxu0 0
    %3062 = vmatpush2.bf16.msra.mxu0 %v1969
    %3063 = vmatprep.mubr.bf16.mxu0 %v586
    %3064 = vmatmul.mubr.bf16.gmra.mxu0 %v585
    %v3065 = vpop.f32.mrf.mxu0
    %v3066 = vadd.f32 %v3026, %v3065
    %v3067 = vpop.f32.mrf.mxu0
    %v3068 = vpop.f32.mrf.mxu0
    %v3069 = vpop.f32.mrf.mxu0
    %3070 = vdwg.mxu0
    %3071 = vmatprep.subr.bf16.mxu0 0
    %3072 = vmatpush1.bf16.msra.mxu0 %v2014
    %3073 = vmatprep.subr.bf16.mxu0 0
    %3074 = vmatpush1.bf16.msra.mxu0 %v2011
    %3075 = vmatprep.subr.bf16.mxu0 0
    %3076 = vmatpush1.bf16.msra.mxu0 %v2008
    %3077 = vmatprep.subr.bf16.mxu0 0
    %3078 = vmatpush1.bf16.msra.mxu0 %v2005
    %3079 = vmatprep.subr.bf16.mxu0 0
    %3080 = vmatpush1.bf16.msra.mxu0 %v2002
    %3081 = vmatprep.subr.bf16.mxu0 0
    %3082 = vmatpush1.bf16.msra.mxu0 %v1999
    %3083 = vmatprep.subr.bf16.mxu0 0
    %3084 = vmatpush1.bf16.msra.mxu0 %v1996
    %3085 = vmatprep.subr.bf16.mxu0 0
    %3086 = vmatpush1.bf16.msra.mxu0 %v1993
    %3087 = vmatprep.subr.bf16.mxu0 0
    %3088 = vmatpush2.bf16.msra.mxu0 %v2038
    %3089 = vmatprep.subr.bf16.mxu0 0
    %3090 = vmatpush2.bf16.msra.mxu0 %v2035
    %3091 = vmatprep.subr.bf16.mxu0 0
    %3092 = vmatpush2.bf16.msra.mxu0 %v2032
    %3093 = vmatprep.subr.bf16.mxu0 0
    %3094 = vmatpush2.bf16.msra.mxu0 %v2029
    %3095 = vmatprep.subr.bf16.mxu0 0
    %3096 = vmatpush2.bf16.msra.mxu0 %v2026
    %3097 = vmatprep.subr.bf16.mxu0 0
    %3098 = vmatpush2.bf16.msra.mxu0 %v2023
    %3099 = vmatprep.subr.bf16.mxu0 0
    %3100 = vmatpush2.bf16.msra.mxu0 %v2020
    %3101 = vmatprep.subr.bf16.mxu0 0
    %3102 = vmatpush2.bf16.msra.mxu0 %v2017
    %3103 = vmatprep.mubr.bf16.mxu0 %v588
    %3104 = vmatmul.mubr.bf16.gmra.mxu0 %v587
    %v3105 = vpop.f32.mrf.mxu0
    %v3106 = vadd.f32 %v3066, %v3105
    %v3107 = vpop.f32.mrf.mxu0
    %v3108 = vpop.f32.mrf.mxu0
    %v3109 = vpop.f32.mrf.mxu0
    %3110 = vdwg.mxu0
    %3111 = vmatprep.subr.bf16.mxu0 0
    %3112 = vmatpush1.bf16.msra.mxu0 %v2062
    %3113 = vmatprep.subr.bf16.mxu0 0
    %3114 = vmatpush1.bf16.msra.mxu0 %v2059
    %3115 = vmatprep.subr.bf16.mxu0 0
    %3116 = vmatpush1.bf16.msra.mxu0 %v2056
    %3117 = vmatprep.subr.bf16.mxu0 0
    %3118 = vmatpush1.bf16.msra.mxu0 %v2053
    %3119 = vmatprep.subr.bf16.mxu0 0
    %3120 = vmatpush1.bf16.msra.mxu0 %v2050
    %3121 = vmatprep.subr.bf16.mxu0 0
    %3122 = vmatpush1.bf16.msra.mxu0 %v2047
    %3123 = vmatprep.subr.bf16.mxu0 0
    %3124 = vmatpush1.bf16.msra.mxu0 %v2044
    %3125 = vmatprep.subr.bf16.mxu0 0
    %3126 = vmatpush1.bf16.msra.mxu0 %v2041
    %3127 = vmatprep.subr.bf16.mxu0 0
    %3128 = vmatpush2.bf16.msra.mxu0 %v2086
    %3129 = vmatprep.subr.bf16.mxu0 0
    %3130 = vmatpush2.bf16.msra.mxu0 %v2083
    %3131 = vmatprep.subr.bf16.mxu0 0
    %3132 = vmatpush2.bf16.msra.mxu0 %v2080
    %3133 = vmatprep.subr.bf16.mxu0 0
    %3134 = vmatpush2.bf16.msra.mxu0 %v2077
    %3135 = vmatprep.subr.bf16.mxu0 0
    %3136 = vmatpush2.bf16.msra.mxu0 %v2074
    %3137 = vmatprep.subr.bf16.mxu0 0
    %3138 = vmatpush2.bf16.msra.mxu0 %v2071
    %3139 = vmatprep.subr.bf16.mxu0 0
    %3140 = vmatpush2.bf16.msra.mxu0 %v2068
    %3141 = vmatprep.subr.bf16.mxu0 0
    %3142 = vmatpush2.bf16.msra.mxu0 %v2065
    %3143 = vmatprep.mubr.bf16.mxu0 %v590
    %3144 = vmatmul.mubr.bf16.gmra.mxu0 %v589
    %v3145 = vpop.f32.mrf.mxu0
    %v3146 = vadd.f32 %v3106, %v3145
    %v3147 = vpop.f32.mrf.mxu0
    %v3148 = vpop.f32.mrf.mxu0
    %v3149 = vpop.f32.mrf.mxu0
    %3150 = vdwg.mxu0
    %3151 = vmatprep.subr.bf16.mxu0 0
    %3152 = vmatpush1.bf16.msra.mxu0 %v2110
    %3153 = vmatprep.subr.bf16.mxu0 0
    %3154 = vmatpush1.bf16.msra.mxu0 %v2107
    %3155 = vmatprep.subr.bf16.mxu0 0
    %3156 = vmatpush1.bf16.msra.mxu0 %v2104
    %3157 = vmatprep.subr.bf16.mxu0 0
    %3158 = vmatpush1.bf16.msra.mxu0 %v2101
    %3159 = vmatprep.subr.bf16.mxu0 0
    %3160 = vmatpush1.bf16.msra.mxu0 %v2098
    %3161 = vmatprep.subr.bf16.mxu0 0
    %3162 = vmatpush1.bf16.msra.mxu0 %v2095
    %3163 = vmatprep.subr.bf16.mxu0 0
    %3164 = vmatpush1.bf16.msra.mxu0 %v2092
    %3165 = vmatprep.subr.bf16.mxu0 0
    %3166 = vmatpush1.bf16.msra.mxu0 %v2089
    %3167 = vmatprep.subr.bf16.mxu0 0
    %3168 = vmatpush2.bf16.msra.mxu0 %v2134
    %3169 = vmatprep.subr.bf16.mxu0 0
    %3170 = vmatpush2.bf16.msra.mxu0 %v2131
    %3171 = vmatprep.subr.bf16.mxu0 0
    %3172 = vmatpush2.bf16.msra.mxu0 %v2128
    %3173 = vmatprep.subr.bf16.mxu0 0
    %3174 = vmatpush2.bf16.msra.mxu0 %v2125
    %3175 = vmatprep.subr.bf16.mxu0 0
    %3176 = vmatpush2.bf16.msra.mxu0 %v2122
    %3177 = vmatprep.subr.bf16.mxu0 0
    %3178 = vmatpush2.bf16.msra.mxu0 %v2119
    %3179 = vmatprep.subr.bf16.mxu0 0
    %3180 = vmatpush2.bf16.msra.mxu0 %v2116
    %3181 = vmatprep.subr.bf16.mxu0 0
    %3182 = vmatpush2.bf16.msra.mxu0 %v2113
    %3183 = vmatprep.mubr.bf16.mxu0 %v592
    %3184 = vmatmul.mubr.bf16.gmra.mxu0 %v591
    %v3185 = vpop.f32.mrf.mxu0
    %v3186 = vadd.f32 %v3146, %v3185
    %v3187 = vpop.f32.mrf.mxu0
    %v3188 = vpop.f32.mrf.mxu0
    %v3189 = vpop.f32.mrf.mxu0
    %3190 = vdwg.mxu0
    %3191 = vmatprep.subr.bf16.mxu0 0
    %3192 = vmatpush1.bf16.msra.mxu0 %v2158
    %3193 = vmatprep.subr.bf16.mxu0 0
    %3194 = vmatpush1.bf16.msra.mxu0 %v2155
    %3195 = vmatprep.subr.bf16.mxu0 0
    %3196 = vmatpush1.bf16.msra.mxu0 %v2152
    %3197 = vmatprep.subr.bf16.mxu0 0
    %3198 = vmatpush1.bf16.msra.mxu0 %v2149
    %3199 = vmatprep.subr.bf16.mxu0 0
    %3200 = vmatpush1.bf16.msra.mxu0 %v2146
    %3201 = vmatprep.subr.bf16.mxu0 0
    %3202 = vmatpush1.bf16.msra.mxu0 %v2143
    %3203 = vmatprep.subr.bf16.mxu0 0
    %3204 = vmatpush1.bf16.msra.mxu0 %v2140
    %3205 = vmatprep.subr.bf16.mxu0 0
    %3206 = vmatpush1.bf16.msra.mxu0 %v2137
    %3207 = vmatprep.subr.bf16.mxu0 0
    %3208 = vmatpush2.bf16.msra.mxu0 %v2182
    %3209 = vmatprep.subr.bf16.mxu0 0
    %3210 = vmatpush2.bf16.msra.mxu0 %v2179
    %3211 = vmatprep.subr.bf16.mxu0 0
    %3212 = vmatpush2.bf16.msra.mxu0 %v2176
    %3213 = vmatprep.subr.bf16.mxu0 0
    %3214 = vmatpush2.bf16.msra.mxu0 %v2173
    %3215 = vmatprep.subr.bf16.mxu0 0
    %3216 = vmatpush2.bf16.msra.mxu0 %v2170
    %3217 = vmatprep.subr.bf16.mxu0 0
    %3218 = vmatpush2.bf16.msra.mxu0 %v2167
    %3219 = vmatprep.subr.bf16.mxu0 0
    %3220 = vmatpush2.bf16.msra.mxu0 %v2164
    %3221 = vmatprep.subr.bf16.mxu0 0
    %3222 = vmatpush2.bf16.msra.mxu0 %v2161
    %3223 = vmatprep.mubr.bf16.mxu0 %v594
    %3224 = vmatmul.mubr.bf16.gmra.mxu0 %v593
    %v3225 = vpop.f32.mrf.mxu0
    %v3226 = vadd.f32 %v3186, %v3225
    %v3227 = vpop.f32.mrf.mxu0
    %v3228 = vpop.f32.mrf.mxu0
    %v3229 = vpop.f32.mrf.mxu0
    %3230 = vdwg.mxu0
    %3231 = vmatprep.subr.bf16.mxu0 0
    %3232 = vmatpush1.bf16.msra.mxu0 %v2206
    %3233 = vmatprep.subr.bf16.mxu0 0
    %3234 = vmatpush1.bf16.msra.mxu0 %v2203
    %3235 = vmatprep.subr.bf16.mxu0 0
    %3236 = vmatpush1.bf16.msra.mxu0 %v2200
    %3237 = vmatprep.subr.bf16.mxu0 0
    %3238 = vmatpush1.bf16.msra.mxu0 %v2197
    %3239 = vmatprep.subr.bf16.mxu0 0
    %3240 = vmatpush1.bf16.msra.mxu0 %v2194
    %3241 = vmatprep.subr.bf16.mxu0 0
    %3242 = vmatpush1.bf16.msra.mxu0 %v2191
    %3243 = vmatprep.subr.bf16.mxu0 0
    %3244 = vmatpush1.bf16.msra.mxu0 %v2188
    %3245 = vmatprep.subr.bf16.mxu0 0
    %3246 = vmatpush1.bf16.msra.mxu0 %v2185
    %3247 = vmatprep.subr.bf16.mxu0 0
    %3248 = vmatpush2.bf16.msra.mxu0 %v2230
    %3249 = vmatprep.subr.bf16.mxu0 0
    %3250 = vmatpush2.bf16.msra.mxu0 %v2227
    %3251 = vmatprep.subr.bf16.mxu0 0
    %3252 = vmatpush2.bf16.msra.mxu0 %v2224
    %3253 = vmatprep.subr.bf16.mxu0 0
    %3254 = vmatpush2.bf16.msra.mxu0 %v2221
    %3255 = vmatprep.subr.bf16.mxu0 0
    %3256 = vmatpush2.bf16.msra.mxu0 %v2218
    %3257 = vmatprep.subr.bf16.mxu0 0
    %3258 = vmatpush2.bf16.msra.mxu0 %v2215
    %3259 = vmatprep.subr.bf16.mxu0 0
    %3260 = vmatpush2.bf16.msra.mxu0 %v2212
    %3261 = vmatprep.subr.bf16.mxu0 0
    %3262 = vmatpush2.bf16.msra.mxu0 %v2209
    %3263 = vmatprep.mubr.bf16.mxu0 %v596
    %3264 = vmatmul.mubr.bf16.gmra.mxu0 %v595
    %v3265 = vpop.f32.mrf.mxu0
    %v3266 = vadd.f32 %v3226, %v3265
    %v3267 = vpop.f32.mrf.mxu0
    %v3268 = vpop.f32.mrf.mxu0
    %v3269 = vpop.f32.mrf.mxu0
    %3270 = vdwg.mxu0
    %3271 = vmatprep.subr.bf16.mxu0 0
    %3272 = vmatpush1.bf16.msra.mxu0 %v2254
    %3273 = vmatprep.subr.bf16.mxu0 0
    %3274 = vmatpush1.bf16.msra.mxu0 %v2251
    %3275 = vmatprep.subr.bf16.mxu0 0
    %3276 = vmatpush1.bf16.msra.mxu0 %v2248
    %3277 = vmatprep.subr.bf16.mxu0 0
    %3278 = vmatpush1.bf16.msra.mxu0 %v2245
    %3279 = vmatprep.subr.bf16.mxu0 0
    %3280 = vmatpush1.bf16.msra.mxu0 %v2242
    %3281 = vmatprep.subr.bf16.mxu0 0
    %3282 = vmatpush1.bf16.msra.mxu0 %v2239
    %3283 = vmatprep.subr.bf16.mxu0 0
    %3284 = vmatpush1.bf16.msra.mxu0 %v2236
    %3285 = vmatprep.subr.bf16.mxu0 0
    %3286 = vmatpush1.bf16.msra.mxu0 %v2233
    %3287 = vmatprep.subr.bf16.mxu0 0
    %3288 = vmatpush2.bf16.msra.mxu0 %v2278
    %3289 = vmatprep.subr.bf16.mxu0 0
    %3290 = vmatpush2.bf16.msra.mxu0 %v2275
    %3291 = vmatprep.subr.bf16.mxu0 0
    %3292 = vmatpush2.bf16.msra.mxu0 %v2272
    %3293 = vmatprep.subr.bf16.mxu0 0
    %3294 = vmatpush2.bf16.msra.mxu0 %v2269
    %3295 = vmatprep.subr.bf16.mxu0 0
    %3296 = vmatpush2.bf16.msra.mxu0 %v2266
    %3297 = vmatprep.subr.bf16.mxu0 0
    %3298 = vmatpush2.bf16.msra.mxu0 %v2263
    %3299 = vmatprep.subr.bf16.mxu0 0
    %3300 = vmatpush2.bf16.msra.mxu0 %v2260
    %3301 = vmatprep.subr.bf16.mxu0 0
    %3302 = vmatpush2.bf16.msra.mxu0 %v2257
    %3303 = vmatprep.mubr.bf16.mxu0 %v598
    %3304 = vmatmul.mubr.bf16.gmra.mxu0 %v597
    %v3305 = vpop.f32.mrf.mxu0
    %v3306 = vadd.f32 %v3266, %v3305
    %v3307 = vpop.f32.mrf.mxu0
    %v3308 = vpop.f32.mrf.mxu0
    %v3309 = vpop.f32.mrf.mxu0
    %3310 = vdwg.mxu0
    %v3311 = vmax.f32 %v2985, 0.0
    %v3312 = vmax.f32 %v2987, 0.0
    %v3313 = vmax.f32 %v3306, 0.0
    %v3314 = vld [vmem:[%s2] sm:$0xff]
    %v3315 = vld [vmem:[%s2 + $0x8] sm:$0xff]
    %v3316 = vld [vmem:[%s2 + $0x10] sm:$0xff]
    %v3317 = vld [vmem:[%s2 + $0x18] sm:$0xff]
    %v3318 = vld [vmem:[%s2 + $0x20] sm:$0xff]
    %v3319 = vld [vmem:[%s2 + $0x28] sm:$0xff]
    %v3320 = vld [vmem:[%s2 + $0x30] sm:$0xff]
    %v3321 = vld [vmem:[%s2 + $0x38] sm:$0xff]
    %v3322 = vld [vmem:[%s2 + $0x40] sm:$0xff]
    %v3323 = vld [vmem:[%s2 + $0x48] sm:$0xff]
    %v3324 = vld [vmem:[%s2 + $0x50] sm:$0xff]
    %v3325 = vld [vmem:[%s2 + $0x58] sm:$0xff]
    %v3326 = vld [vmem:[%s2 + $0x60] sm:$0xff]
    %v3327 = vld [vmem:[%s2 + $0x68] sm:$0xff]
    %v3328 = vld [vmem:[%s2 + $0x70] sm:$0xff]
    %v3329 = vld [vmem:[%s2 + $0x78] sm:$0xff]
    %v3330 = vld [vmem:[%s2 + $0x80] sm:$0xff]
    %v3331 = vld [vmem:[%s2 + $0x88] sm:$0xff]
    %v3332 = vld [vmem:[%s2 + $0x90] sm:$0xff]
    %v3333 = vld [vmem:[%s2 + $0x98] sm:$0xff]
    %v3334 = vld [vmem:[%s2 + $0xa0] sm:$0xff]
    %v3335 = vld [vmem:[%s2 + $0xa8] sm:$0xff]
    %v3336 = vld [vmem:[%s2 + $0xb0] sm:$0xff]
    %v3337 = vld [vmem:[%s2 + $0xb8] sm:$0xff]
    %v3338 = vld [vmem:[%s2 + $0xc0] sm:$0xff]
    %v3339 = vld [vmem:[%s2 + $0xc8] sm:$0xff]
    %v3340 = vld [vmem:[%s2 + $0xd0] sm:$0xff]
    %v3341 = vld [vmem:[%s2 + $0xd8] sm:$0xff]
    %v3342 = vld [vmem:[%s2 + $0xe0] sm:$0xff]
    %v3343 = vld [vmem:[%s2 + $0xe8] sm:$0xff]
    %v3344 = vld [vmem:[%s2 + $0xf0] sm:$0xff]
    %v3345 = vld [vmem:[%s2 + $0xf8] sm:$0xff]
    %v3346 = vld [vmem:[%s2 + $0x100] sm:$0xff]
    %v3347 = vld [vmem:[%s2 + $0x108] sm:$0xff]
    %v3348 = vld [vmem:[%s2 + $0x110] sm:$0xff]
    %v3349 = vld [vmem:[%s2 + $0x118] sm:$0xff]
    %v3350 = vld [vmem:[%s2 + $0x120] sm:$0xff]
    %v3351 = vld [vmem:[%s2 + $0x128] sm:$0xff]
    %v3352 = vld [vmem:[%s2 + $0x130] sm:$0xff]
    %v3353 = vld [vmem:[%s2 + $0x138] sm:$0xff]
    %v3354 = vld [vmem:[%s2 + $0x140] sm:$0xff]
    %v3355 = vld [vmem:[%s2 + $0x148] sm:$0xff]
    %v3356 = vld [vmem:[%s2 + $0x150] sm:$0xff]
    %v3357 = vld [vmem:[%s2 + $0x158] sm:$0xff]
    %v3358 = vld [vmem:[%s2 + $0x160] sm:$0xff]
    %v3359 = vld [vmem:[%s2 + $0x168] sm:$0xff]
    %v3360 = vld [vmem:[%s2 + $0x170] sm:$0xff]
    %v3361 = vld [vmem:[%s2 + $0x178] sm:$0xff]
    %v3362 = vld [vmem:[%s2 + $0x180] sm:$0xff]
    %v3363 = vld [vmem:[%s2 + $0x188] sm:$0xff]
    %v3364 = vld [vmem:[%s2 + $0x190] sm:$0xff]
    %v3365 = vld [vmem:[%s2 + $0x198] sm:$0xff]
    %v3366 = vld [vmem:[%s2 + $0x1a0] sm:$0xff]
    %v3367 = vld [vmem:[%s2 + $0x1a8] sm:$0xff]
    %v3368 = vld [vmem:[%s2 + $0x1b0] sm:$0xff]
    %v3369 = vld [vmem:[%s2 + $0x1b8] sm:$0xff]
    %v3370 = vld [vmem:[%s2 + $0x1c0] sm:$0xff]
    %v3371 = vld [vmem:[%s2 + $0x1c8] sm:$0xff]
    %v3372 = vld [vmem:[%s2 + $0x1d0] sm:$0xff]
    %v3373 = vld [vmem:[%s2 + $0x1d8] sm:$0xff]
    %v3374 = vld [vmem:[%s2 + $0x1e0] sm:$0xff]
    %v3375 = vld [vmem:[%s2 + $0x1e8] sm:$0xff]
    %v3376 = vld [vmem:[%s2 + $0x1f0] sm:$0xff]
    %v3377 = vld [vmem:[%s2 + $0x1f8] sm:$0xff]
    %v3378 = vld [vmem:[%s2 + $0x200] sm:$0xff]
    %v3379 = vld [vmem:[%s2 + $0x208] sm:$0xff]
    %v3380 = vld [vmem:[%s2 + $0x210] sm:$0xff]
    %v3381 = vld [vmem:[%s2 + $0x218] sm:$0xff]
    %v3382 = vld [vmem:[%s2 + $0x220] sm:$0xff]
    %v3383 = vld [vmem:[%s2 + $0x228] sm:$0xff]
    %v3384 = vld [vmem:[%s2 + $0x230] sm:$0xff]
    %v3385 = vld [vmem:[%s2 + $0x238] sm:$0xff]
    %v3386 = vld [vmem:[%s2 + $0x240] sm:$0xff]
    %v3387 = vld [vmem:[%s2 + $0x248] sm:$0xff]
    %v3388 = vld [vmem:[%s2 + $0x250] sm:$0xff]
    %v3389 = vld [vmem:[%s2 + $0x258] sm:$0xff]
    %v3390 = vld [vmem:[%s2 + $0x260] sm:$0xff]
    %v3391 = vld [vmem:[%s2 + $0x268] sm:$0xff]
    %v3392 = vld [vmem:[%s2 + $0x270] sm:$0xff]
    %v3393 = vld [vmem:[%s2 + $0x278] sm:$0xff]
    %v3394 = vld [vmem:[%s2 + $0x280] sm:$0xff]
    %v3395 = vld [vmem:[%s2 + $0x288] sm:$0xff]
    %v3396 = vld [vmem:[%s2 + $0x290] sm:$0xff]
    %v3397 = vld [vmem:[%s2 + $0x298] sm:$0xff]
    %v3398 = vld [vmem:[%s2 + $0x2a0] sm:$0xff]
    %v3399 = vld [vmem:[%s2 + $0x2a8] sm:$0xff]
    %v3400 = vld [vmem:[%s2 + $0x2b0] sm:$0xff]
    %v3401 = vld [vmem:[%s2 + $0x2b8] sm:$0xff]
    %v3402 = vld [vmem:[%s2 + $0x2c0] sm:$0xff]
    %v3403 = vld [vmem:[%s2 + $0x2c8] sm:$0xff]
    %v3404 = vld [vmem:[%s2 + $0x2d0] sm:$0x1]
    %v3405 = vld [vmem:[%s2 + $0x2d8] sm:$0x1]
    %v3406 = vld [vmem:[%s3] sm:$0x3]
    %v3408 = vlaneseq
    %v3409 = vshrl.u32 %v3408, 7
    %v3410 = vsub.s32 0, %v3409
    %v3411 = vrot.slane %v3406, %v3410
    %v3412 = vlaneseq
    %v3413 = vshrl.u32 %v3412, 7
    %v3414 = vsub.s32 1, %v3413
    %v3415 = vrot.slane %v3406, %v3414
    %vm3418 = vcmask 859136
    %v3420 = vsel %vm3418, %v3313, 0
    %vm3422 = vcmask 1040384
    %v3424 = vsel %vm3422, %v3404, 0
    %v3427 = vsel %vm3422, %v3405, 0
    %3429 = vmatprep.subr.mxu0 %v3345
    %3430 = vmatpush1.msra.mxu0 %v3344
    %3431 = vmatprep.subr.mxu0 %v3343
    %3432 = vmatpush1.msra.mxu0 %v3342
    %3433 = vmatprep.subr.mxu0 %v3341
    %3434 = vmatpush1.msra.mxu0 %v3340
    %3435 = vmatprep.subr.mxu0 %v3339
    %3436 = vmatpush1.msra.mxu0 %v3338
    %3437 = vmatprep.subr.mxu0 %v3337
    %3438 = vmatpush1.msra.mxu0 %v3336
    %3439 = vmatprep.subr.mxu0 %v3335
    %3440 = vmatpush1.msra.mxu0 %v3334
    %3441 = vmatprep.subr.mxu0 %v3333
    %3442 = vmatpush1.msra.mxu0 %v3332
    %3443 = vmatprep.subr.mxu0 %v3331
    %3444 = vmatpush1.msra.mxu0 %v3330
    %3445 = vmatprep.subr.mxu0 %v3329
    %3446 = vmatpush1.msra.mxu0 %v3328
    %3447 = vmatprep.subr.mxu0 %v3327
    %3448 = vmatpush1.msra.mxu0 %v3326
    %3449 = vmatprep.subr.mxu0 %v3325
    %3450 = vmatpush1.msra.mxu0 %v3324
    %3451 = vmatprep.subr.mxu0 %v3323
    %3452 = vmatpush1.msra.mxu0 %v3322
    %3453 = vmatprep.subr.mxu0 %v3321
    %3454 = vmatpush1.msra.mxu0 %v3320
    %3455 = vmatprep.subr.mxu0 %v3319
    %3456 = vmatpush1.msra.mxu0 %v3318
    %3457 = vmatprep.subr.mxu0 %v3317
    %3458 = vmatpush1.msra.mxu0 %v3316
    %3459 = vmatprep.subr.mxu0 %v3315
    %3460 = vmatpush1.msra.mxu0 %v3314
    %3461 = vmatprep.subr.mxu0 %v3377
    %3462 = vmatpush2.msra.mxu0 %v3376
    %3463 = vmatprep.subr.mxu0 %v3375
    %3464 = vmatpush2.msra.mxu0 %v3374
    %3465 = vmatprep.subr.mxu0 %v3373
    %3466 = vmatpush2.msra.mxu0 %v3372
    %3467 = vmatprep.subr.mxu0 %v3371
    %3468 = vmatpush2.msra.mxu0 %v3370
    %3469 = vmatprep.subr.mxu0 %v3369
    %3470 = vmatpush2.msra.mxu0 %v3368
    %3471 = vmatprep.subr.mxu0 %v3367
    %3472 = vmatpush2.msra.mxu0 %v3366
    %3473 = vmatprep.subr.mxu0 %v3365
    %3474 = vmatpush2.msra.mxu0 %v3364
    %3475 = vmatprep.subr.mxu0 %v3363
    %3476 = vmatpush2.msra.mxu0 %v3362
    %3477 = vmatprep.subr.mxu0 %v3361
    %3478 = vmatpush2.msra.mxu0 %v3360
    %3479 = vmatprep.subr.mxu0 %v3359
    %3480 = vmatpush2.msra.mxu0 %v3358
    %3481 = vmatprep.subr.mxu0 %v3357
    %3482 = vmatpush2.msra.mxu0 %v3356
    %3483 = vmatprep.subr.mxu0 %v3355
    %3484 = vmatpush2.msra.mxu0 %v3354
    %3485 = vmatprep.subr.mxu0 %v3353
    %3486 = vmatpush2.msra.mxu0 %v3352
    %3487 = vmatprep.subr.mxu0 %v3351
    %3488 = vmatpush2.msra.mxu0 %v3350
    %3489 = vmatprep.subr.mxu0 %v3349
    %3490 = vmatpush2.msra.mxu0 %v3348
    %3491 = vmatprep.subr.mxu0 %v3347
    %3492 = vmatpush2.msra.mxu0 %v3346
    %3493 = vmatprep.mubr.f32.mxu0 %v3312
    %3494 = vmatmul.mubr.f32.gmra.mxu0 %v3311
    %v3495 = vpop.f32.mrf.mxu0
    %v3496 = vadd.f32 %v3411, %v3495
    %v3497 = vpop.f32.mrf.mxu0
    %v3498 = vadd.f32 %v3415, %v3497
    %3499 = vdwg.mxu0
    %3500 = vmatprep.subr.mxu0 0.0
    %3501 = vmatpush1.msra.mxu0 0.0
    %3502 = vmatprep.subr.mxu0 0.0
    %3503 = vmatpush1.msra.mxu0 0.0
    %3504 = vmatprep.subr.mxu0 %v3427
    %3505 = vmatpush1.msra.mxu0 %v3424
    %3506 = vmatprep.subr.mxu0 %v3403
    %3507 = vmatpush1.msra.mxu0 %v3402
    %3508 = vmatprep.subr.mxu0 %v3401
    %3509 = vmatpush1.msra.mxu0 %v3400
    %3510 = vmatprep.subr.mxu0 %v3399
    %3511 = vmatpush1.msra.mxu0 %v3398
    %3512 = vmatprep.subr.mxu0 %v3397
    %3513 = vmatpush1.msra.mxu0 %v3396
    %3514 = vmatprep.subr.mxu0 %v3395
    %3515 = vmatpush1.msra.mxu0 %v3394
    %3516 = vmatprep.subr.mxu0 %v3393
    %3517 = vmatpush1.msra.mxu0 %v3392
    %3518 = vmatprep.subr.mxu0 %v3391
    %3519 = vmatpush1.msra.mxu0 %v3390
    %3520 = vmatprep.subr.mxu0 %v3389
    %3521 = vmatpush1.msra.mxu0 %v3388
    %3522 = vmatprep.subr.mxu0 %v3387
    %3523 = vmatpush1.msra.mxu0 %v3386
    %3524 = vmatprep.subr.mxu0 %v3385
    %3525 = vmatpush1.msra.mxu0 %v3384
    %3526 = vmatprep.subr.mxu0 %v3383
    %3527 = vmatpush1.msra.mxu0 %v3382
    %3528 = vmatprep.subr.mxu0 %v3381
    %3529 = vmatpush1.msra.mxu0 %v3380
    %3530 = vmatprep.subr.mxu0 %v3379
    %3531 = vmatpush1.msra.mxu0 %v3378
    %3532 = vmatprep.subr.mxu0 0.0
    %3533 = vmatpush2.msra.mxu0 0.0
    %3534 = vmatprep.subr.mxu0 0.0
    %3535 = vmatpush2.msra.mxu0 0.0
    %3536 = vmatprep.subr.mxu0 0.0
    %3537 = vmatpush2.msra.mxu0 0.0
    %3538 = vmatprep.subr.mxu0 0.0
    %3539 = vmatpush2.msra.mxu0 0.0
    %3540 = vmatprep.subr.mxu0 0.0
    %3541 = vmatpush2.msra.mxu0 0.0
    %3542 = vmatprep.subr.mxu0 0.0
    %3543 = vmatpush2.msra.mxu0 0.0
    %3544 = vmatprep.subr.mxu0 0.0
    %3545 = vmatpush2.msra.mxu0 0.0
    %3546 = vmatprep.subr.mxu0 0.0
    %3547 = vmatpush2.msra.mxu0 0.0
    %3548 = vmatprep.subr.mxu0 0.0
    %3549 = vmatpush2.msra.mxu0 0.0
    %3550 = vmatprep.subr.mxu0 0.0
    %3551 = vmatpush2.msra.mxu0 0.0
    %3552 = vmatprep.subr.mxu0 0.0
    %3553 = vmatpush2.msra.mxu0 0.0
    %3554 = vmatprep.subr.mxu0 0.0
    %3555 = vmatpush2.msra.mxu0 0.0
    %3556 = vmatprep.subr.mxu0 0.0
    %3557 = vmatpush2.msra.mxu0 0.0
    %3558 = vmatprep.subr.mxu0 0.0
    %3559 = vmatpush2.msra.mxu0 0.0
    %3560 = vmatprep.subr.mxu0 0.0
    %3561 = vmatpush2.msra.mxu0 0.0
    %3562 = vmatprep.subr.mxu0 0.0
    %3563 = vmatpush2.msra.mxu0 0.0
    %3564 = vmatprep.mubr.f32.mxu0 0.0
    %3565 = vmatmul.mubr.f32.gmra.mxu0 %v3420
    %v3566 = vpop.f32.mrf.mxu0
    %v3567 = vadd.f32 %v3496, %v3566
    %v3568 = vpop.f32.mrf.mxu0
    %v3569 = vadd.f32 %v3498, %v3568
    %3570 = vdwg.mxu0
    %v3571 = vmax.f32 %v3567, 0.0
    %v3572 = vmax.f32 %v3569, 0.0
    %v3573 = vld [vmem:[%s4] sm:$0xff]
    %v3574 = vld [vmem:[%s4 + $0x8] sm:$0xff]
    %v3575 = vld [vmem:[%s4 + $0x10] sm:$0xff]
    %v3576 = vld [vmem:[%s4 + $0x18] sm:$0xff]
    %v3577 = vld [vmem:[%s4 + $0x20] sm:$0xff]
    %v3578 = vld [vmem:[%s4 + $0x28] sm:$0xff]
    %v3579 = vld [vmem:[%s4 + $0x30] sm:$0xff]
    %v3580 = vld [vmem:[%s4 + $0x38] sm:$0xff]
    %v3581 = vld [vmem:[%s4 + $0x40] sm:$0xff]
    %v3582 = vld [vmem:[%s4 + $0x48] sm:$0xff]
    %v3583 = vld [vmem:[%s4 + $0x50] sm:$0xff]
    %v3584 = vld [vmem:[%s4 + $0x58] sm:$0xff]
    %v3585 = vld [vmem:[%s4 + $0x60] sm:$0xff]
    %v3586 = vld [vmem:[%s4 + $0x68] sm:$0xff]
    %v3587 = vld [vmem:[%s4 + $0x70] sm:$0xff]
    %v3588 = vld [vmem:[%s4 + $0x78] sm:$0xff]
    %v3589 = vld [vmem:[%s4 + $0x80] sm:$0xff]
    %v3590 = vld [vmem:[%s4 + $0x88] sm:$0xff]
    %v3591 = vld [vmem:[%s4 + $0x90] sm:$0xff]
    %v3592 = vld [vmem:[%s4 + $0x98] sm:$0xff]
    %v3593 = vld [vmem:[%s4 + $0xa0] sm:$0xff]
    %v3594 = vld [vmem:[%s4 + $0xa8] sm:$0xff]
    %v3595 = vld [vmem:[%s4 + $0xb0] sm:$0xff]
    %v3596 = vld [vmem:[%s4 + $0xb8] sm:$0xff]
    %v3597 = vld [vmem:[%s4 + $0xc0] sm:$0xff]
    %v3598 = vld [vmem:[%s4 + $0xc8] sm:$0xff]
    %v3599 = vld [vmem:[%s4 + $0xd0] sm:$0xff]
    %v3600 = vld [vmem:[%s4 + $0xd8] sm:$0xff]
    %v3601 = vld [vmem:[%s4 + $0xe0] sm:$0xff]
    %v3602 = vld [vmem:[%s4 + $0xe8] sm:$0xff]
    %v3603 = vld [vmem:[%s4 + $0xf0] sm:$0xff]
    %v3604 = vld [vmem:[%s4 + $0xf8] sm:$0xff]
    %s3605 = sld [smem:[#allocation2 + $0x1]]
    %v3606 = vstv %s3605
    %3607 = vmatprep.subr.mxu0 0.0
    %3608 = vmatpush1.msra.mxu0 %v3588
    %3609 = vmatprep.subr.mxu0 0.0
    %3610 = vmatpush1.msra.mxu0 %v3587
    %3611 = vmatprep.subr.mxu0 0.0
    %3612 = vmatpush1.msra.mxu0 %v3586
    %3613 = vmatprep.subr.mxu0 0.0
    %3614 = vmatpush1.msra.mxu0 %v3585
    %3615 = vmatprep.subr.mxu0 0.0
    %3616 = vmatpush1.msra.mxu0 %v3584
    %3617 = vmatprep.subr.mxu0 0.0
    %3618 = vmatpush1.msra.mxu0 %v3583
    %3619 = vmatprep.subr.mxu0 0.0
    %3620 = vmatpush1.msra.mxu0 %v3582
    %3621 = vmatprep.subr.mxu0 0.0
    %3622 = vmatpush1.msra.mxu0 %v3581
    %3623 = vmatprep.subr.mxu0 0.0
    %3624 = vmatpush1.msra.mxu0 %v3580
    %3625 = vmatprep.subr.mxu0 0.0
    %3626 = vmatpush1.msra.mxu0 %v3579
    %3627 = vmatprep.subr.mxu0 0.0
    %3628 = vmatpush1.msra.mxu0 %v3578
    %3629 = vmatprep.subr.mxu0 0.0
    %3630 = vmatpush1.msra.mxu0 %v3577
    %3631 = vmatprep.subr.mxu0 0.0
    %3632 = vmatpush1.msra.mxu0 %v3576
    %3633 = vmatprep.subr.mxu0 0.0
    %3634 = vmatpush1.msra.mxu0 %v3575
    %3635 = vmatprep.subr.mxu0 0.0
    %3636 = vmatpush1.msra.mxu0 %v3574
    %3637 = vmatprep.subr.mxu0 0.0
    %3638 = vmatpush1.msra.mxu0 %v3573
    %3639 = vmatprep.subr.mxu0 0.0
    %3640 = vmatpush2.msra.mxu0 %v3604
    %3641 = vmatprep.subr.mxu0 0.0
    %3642 = vmatpush2.msra.mxu0 %v3603
    %3643 = vmatprep.subr.mxu0 0.0
    %3644 = vmatpush2.msra.mxu0 %v3602
    %3645 = vmatprep.subr.mxu0 0.0
    %3646 = vmatpush2.msra.mxu0 %v3601
    %3647 = vmatprep.subr.mxu0 0.0
    %3648 = vmatpush2.msra.mxu0 %v3600
    %3649 = vmatprep.subr.mxu0 0.0
    %3650 = vmatpush2.msra.mxu0 %v3599
    %3651 = vmatprep.subr.mxu0 0.0
    %3652 = vmatpush2.msra.mxu0 %v3598
    %3653 = vmatprep.subr.mxu0 0.0
    %3654 = vmatpush2.msra.mxu0 %v3597
    %3655 = vmatprep.subr.mxu0 0.0
    %3656 = vmatpush2.msra.mxu0 %v3596
    %3657 = vmatprep.subr.mxu0 0.0
    %3658 = vmatpush2.msra.mxu0 %v3595
    %3659 = vmatprep.subr.mxu0 0.0
    %3660 = vmatpush2.msra.mxu0 %v3594
    %3661 = vmatprep.subr.mxu0 0.0
    %3662 = vmatpush2.msra.mxu0 %v3593
    %3663 = vmatprep.subr.mxu0 0.0
    %3664 = vmatpush2.msra.mxu0 %v3592
    %3665 = vmatprep.subr.mxu0 0.0
    %3666 = vmatpush2.msra.mxu0 %v3591
    %3667 = vmatprep.subr.mxu0 0.0
    %3668 = vmatpush2.msra.mxu0 %v3590
    %3669 = vmatprep.subr.mxu0 0.0
    %3670 = vmatpush2.msra.mxu0 %v3589
    %3671 = vmatprep.mubr.f32.mxu0 %v3572
    %3672 = vmatmul.mubr.f32.gmra.mxu0 %v3571
    %v3673 = vpop.f32.mrf.mxu0
    %v3674 = vadd.f32 %v3606, %v3673
    %v3675 = vpop.f32.mrf.mxu0
    %3676 = vdwg.mxu0
    %v3677 = vtanh.pop %v3674
    %vm3678 = vcmask 7168
    %3679 = vst.msk [vmem:[%s6] sm:$0xff] %vm3678, %v3677
    // Predicated region
    $region30: #{tpu_custom_call.1} parent=1 // pred_check
      _
    $region31: #{tpu_custom_call.1} parent=1 // pred_check_branch
      %3681 = sbr.rel (0) target = $region33
    $region32: #{tpu_custom_call.1} parent=1 // pred_region
      _
    $region33: #{tpu_custom_call.1} parent=1 // pred_fallthru
      _
    // Predicated region
    $region34: #{tpu_custom_call.1} parent=1 // pred_check
      _
    $region35: #{tpu_custom_call.1} parent=1 // pred_check_branch
      %3683 = sbr.rel (0) target = $region37
    $region36: #{tpu_custom_call.1} parent=1 // pred_region
      _
    $region37: #{tpu_custom_call.1} parent=1 // pred_fallthru
      _
    %3684 = vsyncpa [#allocation3], 1

</llo_original>
